<compile_context>
chip_gen: v7x
topology: tpu7x:2x2x1
jax: 0.10.0
libtpu: 0.0.40
codegen_flags: <defaults>
</compile_context>

<pallas_src>
import math

import jax
import jax.numpy as jnp
from jax.experimental import pallas as pl
from jax.experimental.pallas import tpu as pltpu

HIDDEN = 81      # hidden_dim of encoders and modified_mlp (from the module)
HID_PAD = 128    # lane-aligned padded hidden size


def _pinn_kernel(x_ref,
                 wcat_ref, bcat_ref,        # fused [encoder_1 | encoder_2 | fc1]
                 w2_ref, b2_ref,            # modified_mlp.fc2
                 w3_ref, b3_ref,            # modified_mlp.fc3
                 w4_ref, b4_ref,            # modified_mlp.fc4
                 w5_ref, b5_ref,            # modified_mlp.fc5 (stored as (1,128) row)
                 o_ref):
    x = x_ref[...]                                            # (tm, 2)

    # Fused first layer: one (tm,2)@(2,384) MXU pass covers enc1, enc2, fc1.
    first = jnp.tanh(
        jnp.dot(x, wcat_ref[...], preferred_element_type=jnp.float32)
        + bcat_ref[...])                                      # (tm, 384)
    enc1 = first[:, 0:HID_PAD]                                # lane-aligned slices
    enc2 = first[:, HID_PAD:2 * HID_PAD]
    h = first[:, 2 * HID_PAD:3 * HID_PAD]

    # Gating:  h*enc1 + (1-h)*enc2  ==  enc2 + h*(enc1-enc2)
    diff = enc1 - enc2
    h = enc2 + h * diff

    h = jnp.tanh(
        jnp.dot(h, w2_ref[...], preferred_element_type=jnp.float32)
        + b2_ref[...])
    h = enc2 + h * diff

    h = jnp.tanh(
        jnp.dot(h, w3_ref[...], preferred_element_type=jnp.float32)
        + b3_ref[...])
    h = enc2 + h * diff

    h = jnp.tanh(
        jnp.dot(h, w4_ref[...], preferred_element_type=jnp.float32)
        + b4_ref[...])
    h = enc2 + h * diff

    # Final layer, lane-dense: (1,128) @ (128, tm)  ->  (1, tm) row.
    out_row = jnp.dot(w5_ref[...], h.T,
                      preferred_element_type=jnp.float32) + b5_ref[...]  # (1, tm)

    o_ref[...] = (-jnp.exp(out_row))[None]                    # (1, 1, tm)


def pinn_forward(t, z, params, *, tm=256):
    """Pallas implementation of pinn.forward(t, z).

    t, z: (N, 1) float32. Returns (N, 1) float32 = -exp(modified_mlp(...)).
    """
    # --- glue: normalization + concat (trivial elementwise / layout work) ---
    t_norm = 2.0 * (t / 10.0) - 1.0
    z_norm = 2.0 * ((z + 99.0) / 99.0) - 1.0
    x = jnp.concatenate([t_norm, z_norm], axis=-1).astype(jnp.float32)   # (N, 2)

    N = x.shape[0]
    G = pl.cdiv(N, tm)
    n_pad = G * tm
    if n_pad != N:
        x = jnp.pad(x, ((0, n_pad - N), (0, 0)))

    # --- weight padding / fusion (exact zeros; numerics unchanged) ---
    pad_o = HID_PAD - HIDDEN

    def pad_cols(w):                      # (in, 81) -> (in, 128)
        return jnp.pad(w, ((0, 0), (0, pad_o)))

    def pad_sq(w):                        # (81, 81) -> (128, 128)
        return jnp.pad(w, ((0, pad_o), (0, pad_o)))

    wcat = jnp.concatenate(
        [pad_cols(params["we1"]), pad_cols(params["we2"]), pad_cols(params["w1"])],
        axis=1)                                                        # (2, 384)
    bcat = jnp.concatenate(
        [pad_cols(params["be1"]), pad_cols(params["be2"]), pad_cols(params["b1"])],
        axis=1)                                                        # (1, 384)
    w2 = pad_sq(params["w2"]); b2 = pad_cols(params["b2"])             # (128,128),(1,128)
    w3 = pad_sq(params["w3"]); b3 = pad_cols(params["b3"])
    w4 = pad_sq(params["w4"]); b4 = pad_cols(params["b4"])
    w5_row = jnp.pad(params["w5"], ((0, pad_o), (0, 0))).T             # (1, 128)
    b5 = params["b5"]                                                  # (1, 1)

    weights = [wcat, bcat, w2, b2, w3, b3, w4, b4, w5_row, b5]

    def full_spec(arr):
        # Grid-invariant full-array block (constant index_map -> no per-step
        # re-DMA of the ~110 KB of weights).
        nd = arr.ndim
        return pl.BlockSpec(arr.shape, lambda i, _nd=nd: (0,) * _nd)

    grid_spec = pltpu.PrefetchScalarGridSpec(
        num_scalar_prefetch=0,
        grid=(G,),
        in_specs=[pl.BlockSpec((tm, 2), lambda i: (i, 0))]
        + [full_spec(w) for w in weights],
        # Lane-dense output: last two block dims (1, tm) equal the array dims.
        out_specs=pl.BlockSpec((1, 1, tm), lambda i: (i, 0, 0)),
    )

    out3 = pl.pallas_call(
        _pinn_kernel,
        out_shape=jax.ShapeDtypeStruct((G, 1, tm), jnp.float32),
        grid_spec=grid_spec,
        compiler_params=pltpu.CompilerParams(
            dimension_semantics=("parallel",)),
    )(x, *weights)

    return out3.reshape(n_pad, 1)[:N]


# ------------------------ parameter initialization -------------------------
def xavier_uniform(key, fan_in, fan_out):
    """Matches nn.init.xavier_uniform_ on a (fan_out, fan_in) Linear weight;
    we generate the transposed (fan_in, fan_out) layout directly."""
    bound = math.sqrt(6.0 / (fan_in + fan_out))
    return jax.random.uniform(key, (fan_in, fan_out), jnp.float32,
                              minval=-bound, maxval=bound)


def init_params(key):
    keys = jax.random.split(key, 7)
    params = {
        # encoder_1: Linear(2, 81)
        "we1": xavier_uniform(keys[0], 2, HIDDEN),
        "be1": jnp.zeros((1, HIDDEN), jnp.float32),
        # encoder_2: Linear(2, 81)
        "we2": xavier_uniform(keys[1], 2, HIDDEN),
        "be2": jnp.zeros((1, HIDDEN), jnp.float32),
        # modified_mlp
        "w1": xavier_uniform(keys[2], 2, HIDDEN),
        "b1": jnp.zeros((1, HIDDEN), jnp.float32),
        "w2": xavier_uniform(keys[3], HIDDEN, HIDDEN),
        "b2": jnp.zeros((1, HIDDEN), jnp.float32),
        "w3": xavier_uniform(keys[4], HIDDEN, HIDDEN),
        "b3": jnp.zeros((1, HIDDEN), jnp.float32),
        "w4": xavier_uniform(keys[5], HIDDEN, HIDDEN),
        "b4": jnp.zeros((1, HIDDEN), jnp.float32),
        "w5": xavier_uniform(keys[6], HIDDEN, 1),
        "b5": jnp.zeros((1, 1), jnp.float32),
    }
    return params


# ------------------------------ reference ----------------------------------
def pinn_reference(t, z, p):
    t_norm = 2.0 * (t / 10.0) - 1.0
    z_norm = 2.0 * ((z + 99.0) / 99.0) - 1.0
    x = jnp.concatenate([t_norm, z_norm], axis=-1)
    enc1 = jnp.tanh(x @ p["we1"] + p["be1"])
    enc2 = jnp.tanh(x @ p["we2"] + p["be2"])
    h = jnp.tanh(x @ p["w1"] + p["b1"])
    h = h * enc1 + (1.0 - h) * enc2
    h = jnp.tanh(h @ p["w2"] + p["b2"])
    h = h * enc1 + (1.0 - h) * enc2
    h = jnp.tanh(h @ p["w3"] + p["b3"])
    h = h * enc1 + (1.0 - h) * enc2
    h = jnp.tanh(h @ p["w4"] + p["b4"])
    h = h * enc1 + (1.0 - h) * enc2
    out = h @ p["w5"] + p["b5"]
    return -jnp.exp(out)


# NOTE: random_coefficients (self.xi, shape (1, nkl)) is a trainable parameter
# unused in pinn.forward; it is not part of the kernel.
# TODO(synk): random_coefficients.forward (xi.repeat) is not exercised by
# pinn.forward and is therefore not implemented as a kernel.

if __name__ == "__main__":
    key = jax.random.PRNGKey(0)
    pkey, tkey, zkey = jax.random.split(key, 3)
    params = init_params(pkey)

    N = 1024  # number of collocation points (t, z) pairs; grid has 4 steps
    t = jax.random.uniform(tkey, (N, 1), jnp.float32, minval=0.0, maxval=10.0)
    z = jax.random.uniform(zkey, (N, 1), jnp.float32, minval=-99.0, maxval=0.0)

    out = pinn_forward(t, z, params, tm=256)
    out = jax.block_until_ready(out)

    ref = pinn_reference(t, z, params)
    assert out.shape == (N, 1)
    assert jnp.allclose(out, ref, atol=1e-5, rtol=1e-5), (
        f"max err {jnp.max(jnp.abs(out - ref))}")

    print("KERNEL_OK")
</pallas_src>

<mosaic_0001>
module attributes {stable_mosaic.version = 11 : i64} {
  func.func @_pinn_kernel(%arg0: i32, %arg1: memref<256x2xf32, #tpu.memory_space<vmem>>, %arg2: memref<2x384xf32, #tpu.memory_space<vmem>>, %arg3: memref<1x384xf32, #tpu.memory_space<vmem>>, %arg4: memref<128x128xf32, #tpu.memory_space<vmem>>, %arg5: memref<1x128xf32, #tpu.memory_space<vmem>>, %arg6: memref<128x128xf32, #tpu.memory_space<vmem>>, %arg7: memref<1x128xf32, #tpu.memory_space<vmem>>, %arg8: memref<128x128xf32, #tpu.memory_space<vmem>>, %arg9: memref<1x128xf32, #tpu.memory_space<vmem>>, %arg10: memref<1x128xf32, #tpu.memory_space<vmem>>, %arg11: memref<1x1xf32, #tpu.memory_space<vmem>>, %arg12: memref<1x1x256xf32, #tpu.memory_space<vmem>>) attributes {dimension_semantics = [#tpu.dimension_semantics<parallel>], iteration_bounds = array<i64: 4>, scalar_prefetch = 0 : i64, scratch_operands = 0 : i64, tpu.core_type = #tpu.core_type<tc>, window_params = [{transform_indices = @transform_0, window_bounds = array<i64: 256, 2>}, {pipeline_mode = #tpu.pipeline_mode<synchronous>, transform_indices = @transform_1, window_bounds = array<i64: 2, 384>}, {pipeline_mode = #tpu.pipeline_mode<synchronous>, transform_indices = @transform_2, window_bounds = array<i64: 1, 384>}, {pipeline_mode = #tpu.pipeline_mode<synchronous>, transform_indices = @transform_3, window_bounds = array<i64: 128, 128>}, {pipeline_mode = #tpu.pipeline_mode<synchronous>, transform_indices = @transform_4, window_bounds = array<i64: 1, 128>}, {pipeline_mode = #tpu.pipeline_mode<synchronous>, transform_indices = @transform_5, window_bounds = array<i64: 128, 128>}, {pipeline_mode = #tpu.pipeline_mode<synchronous>, transform_indices = @transform_6, window_bounds = array<i64: 1, 128>}, {pipeline_mode = #tpu.pipeline_mode<synchronous>, transform_indices = @transform_7, window_bounds = array<i64: 128, 128>}, {pipeline_mode = #tpu.pipeline_mode<synchronous>, transform_indices = @transform_8, window_bounds = array<i64: 1, 128>}, {pipeline_mode = #tpu.pipeline_mode<synchronous>, transform_indices = @transform_9, window_bounds = array<i64: 1, 128>}, {pipeline_mode = #tpu.pipeline_mode<synchronous>, transform_indices = @transform_10, window_bounds = array<i64: 1, 1>}, {transform_indices = @transform_11, window_bounds = array<i64: 1, 1, 256>}]} {
    %c0 = arith.constant 0 : index
    %c0_0 = arith.constant 0 : index
    %0 = vector.load %arg1[%c0, %c0_0] : memref<256x2xf32, #tpu.memory_space<vmem>>, vector<256x2xf32>
    %c0_1 = arith.constant 0 : index
    %c0_2 = arith.constant 0 : index
    %1 = vector.load %arg2[%c0_1, %c0_2] : memref<2x384xf32, #tpu.memory_space<vmem>>, vector<2x384xf32>
    %cst = arith.constant dense<0.000000e+00> : vector<256x384xf32>
    %2 = tpu.matmul %0, %1, %cst {dimension_numbers = #tpu.dot_dimension_numbers<[1], [0], [0], [1], [0, 0, 1, 1], [], []>} : vector<256x2xf32>, vector<2x384xf32>, vector<256x384xf32> -> vector<256x384xf32>
    %c0_3 = arith.constant 0 : index
    %c0_4 = arith.constant 0 : index
    %3 = vector.load %arg3[%c0_3, %c0_4] : memref<1x384xf32, #tpu.memory_space<vmem>>, vector<1x384xf32>
    %4 = vector.broadcast %3 : vector<1x384xf32> to vector<256x384xf32>
    %5 = arith.addf %2, %4 : vector<256x384xf32>
    %6 = math.tanh %5 : vector<256x384xf32>
    %7 = vector.extract_strided_slice %6 {offsets = [0, 0], sizes = [256, 128], strides = [1, 1]} : vector<256x384xf32> to vector<256x128xf32>
    %8 = vector.extract_strided_slice %6 {offsets = [0, 128], sizes = [256, 128], strides = [1, 1]} : vector<256x384xf32> to vector<256x128xf32>
    %9 = vector.extract_strided_slice %6 {offsets = [0, 256], sizes = [256, 128], strides = [1, 1]} : vector<256x384xf32> to vector<256x128xf32>
    %10 = arith.subf %7, %8 : vector<256x128xf32>
    %11 = arith.mulf %9, %10 : vector<256x128xf32>
    %12 = arith.addf %8, %11 : vector<256x128xf32>
    %c0_5 = arith.constant 0 : index
    %c0_6 = arith.constant 0 : index
    %13 = vector.load %arg4[%c0_5, %c0_6] : memref<128x128xf32, #tpu.memory_space<vmem>>, vector<128x128xf32>
    %cst_7 = arith.constant dense<0.000000e+00> : vector<256x128xf32>
    %14 = tpu.matmul %12, %13, %cst_7 {dimension_numbers = #tpu.dot_dimension_numbers<[1], [0], [0], [1], [0, 0, 1, 1], [], []>} : vector<256x128xf32>, vector<128x128xf32>, vector<256x128xf32> -> vector<256x128xf32>
    %c0_8 = arith.constant 0 : index
    %c0_9 = arith.constant 0 : index
    %15 = vector.load %arg5[%c0_8, %c0_9] : memref<1x128xf32, #tpu.memory_space<vmem>>, vector<1x128xf32>
    %16 = vector.broadcast %15 : vector<1x128xf32> to vector<256x128xf32>
    %17 = arith.addf %14, %16 : vector<256x128xf32>
    %18 = math.tanh %17 : vector<256x128xf32>
    %19 = arith.mulf %18, %10 : vector<256x128xf32>
    %20 = arith.addf %8, %19 : vector<256x128xf32>
    %c0_10 = arith.constant 0 : index
    %c0_11 = arith.constant 0 : index
    %21 = vector.load %arg6[%c0_10, %c0_11] : memref<128x128xf32, #tpu.memory_space<vmem>>, vector<128x128xf32>
    %cst_12 = arith.constant dense<0.000000e+00> : vector<256x128xf32>
    %22 = tpu.matmul %20, %21, %cst_12 {dimension_numbers = #tpu.dot_dimension_numbers<[1], [0], [0], [1], [0, 0, 1, 1], [], []>} : vector<256x128xf32>, vector<128x128xf32>, vector<256x128xf32> -> vector<256x128xf32>
    %c0_13 = arith.constant 0 : index
    %c0_14 = arith.constant 0 : index
    %23 = vector.load %arg7[%c0_13, %c0_14] : memref<1x128xf32, #tpu.memory_space<vmem>>, vector<1x128xf32>
    %24 = vector.broadcast %23 : vector<1x128xf32> to vector<256x128xf32>
    %25 = arith.addf %22, %24 : vector<256x128xf32>
    %26 = math.tanh %25 : vector<256x128xf32>
    %27 = arith.mulf %26, %10 : vector<256x128xf32>
    %28 = arith.addf %8, %27 : vector<256x128xf32>
    %c0_15 = arith.constant 0 : index
    %c0_16 = arith.constant 0 : index
    %29 = vector.load %arg8[%c0_15, %c0_16] : memref<128x128xf32, #tpu.memory_space<vmem>>, vector<128x128xf32>
    %cst_17 = arith.constant dense<0.000000e+00> : vector<256x128xf32>
    %30 = tpu.matmul %28, %29, %cst_17 {dimension_numbers = #tpu.dot_dimension_numbers<[1], [0], [0], [1], [0, 0, 1, 1], [], []>} : vector<256x128xf32>, vector<128x128xf32>, vector<256x128xf32> -> vector<256x128xf32>
    %c0_18 = arith.constant 0 : index
    %c0_19 = arith.constant 0 : index
    %31 = vector.load %arg9[%c0_18, %c0_19] : memref<1x128xf32, #tpu.memory_space<vmem>>, vector<1x128xf32>
    %32 = vector.broadcast %31 : vector<1x128xf32> to vector<256x128xf32>
    %33 = arith.addf %30, %32 : vector<256x128xf32>
    %34 = math.tanh %33 : vector<256x128xf32>
    %35 = arith.mulf %34, %10 : vector<256x128xf32>
    %36 = arith.addf %8, %35 : vector<256x128xf32>
    %c0_20 = arith.constant 0 : index
    %c0_21 = arith.constant 0 : index
    %37 = vector.load %arg10[%c0_20, %c0_21] : memref<1x128xf32, #tpu.memory_space<vmem>>, vector<1x128xf32>
    %38 = tpu.transpose %36, [1, 0] : vector<256x128xf32> -> vector<128x256xf32>
    %cst_22 = arith.constant dense<0.000000e+00> : vector<1x256xf32>
    %39 = tpu.matmul %37, %38, %cst_22 {dimension_numbers = #tpu.dot_dimension_numbers<[1], [0], [0], [1], [0, 0, 1, 1], [], []>} : vector<1x128xf32>, vector<128x256xf32>, vector<1x256xf32> -> vector<1x256xf32>
    %c0_23 = arith.constant 0 : index
    %c0_24 = arith.constant 0 : index
    %40 = vector.load %arg11[%c0_23, %c0_24] : memref<1x1xf32, #tpu.memory_space<vmem>>, vector<1x1xf32>
    %41 = vector.broadcast %40 : vector<1x1xf32> to vector<1x256xf32>
    %42 = arith.addf %39, %41 : vector<1x256xf32>
    %43 = math.exp %42 : vector<1x256xf32>
    %cst_25 = arith.constant 0.000000e+00 : f32
    %44 = vector.broadcast %cst_25 : f32 to vector<1x256xf32>
    %45 = arith.subf %44, %43 : vector<1x256xf32>
    %46 = vector.shape_cast %45 : vector<1x256xf32> to vector<1x1x256xf32>
    %c0_26 = arith.constant 0 : index
    %c0_27 = arith.constant 0 : index
    %c0_28 = arith.constant 0 : index
    %47 = vector.load %arg12[%c0_26, %c0_27, %c0_28] : memref<1x1x256xf32, #tpu.memory_space<vmem>>, vector<1x1x256xf32>
    tpu.vector_store %arg12[%c0_26, %c0_27, %c0_28], %46 {strides = array<i32>} : memref<1x1x256xf32, #tpu.memory_space<vmem>>, vector<1x1x256xf32>,
    return
  }
  func.func @transform_0(%arg0: i32) -> (i32, i32) {
    %c0_i32 = arith.constant 0 : i32
    %c0_i32_0 = arith.constant 0 : i32
    return %arg0, %c0_i32 : i32, i32
  }
  func.func @transform_1(%arg0: i32) -> (i32, i32) {
    %c0_i32 = arith.constant 0 : i32
    %c0_i32_0 = arith.constant 0 : i32
    %c0_i32_1 = arith.constant 0 : i32
    return %c0_i32, %c0_i32_0 : i32, i32
  }
  func.func @transform_2(%arg0: i32) -> (i32, i32) {
    %c0_i32 = arith.constant 0 : i32
    %c0_i32_0 = arith.constant 0 : i32
    %c0_i32_1 = arith.constant 0 : i32
    return %c0_i32, %c0_i32_0 : i32, i32
  }
  func.func @transform_3(%arg0: i32) -> (i32, i32) {
    %c0_i32 = arith.constant 0 : i32
    %c0_i32_0 = arith.constant 0 : i32
    %c0_i32_1 = arith.constant 0 : i32
    return %c0_i32, %c0_i32_0 : i32, i32
  }
  func.func @transform_4(%arg0: i32) -> (i32, i32) {
    %c0_i32 = arith.constant 0 : i32
    %c0_i32_0 = arith.constant 0 : i32
    %c0_i32_1 = arith.constant 0 : i32
    return %c0_i32, %c0_i32_0 : i32, i32
  }
  func.func @transform_5(%arg0: i32) -> (i32, i32) {
    %c0_i32 = arith.constant 0 : i32
    %c0_i32_0 = arith.constant 0 : i32
    %c0_i32_1 = arith.constant 0 : i32
    return %c0_i32, %c0_i32_0 : i32, i32
  }
  func.func @transform_6(%arg0: i32) -> (i32, i32) {
    %c0_i32 = arith.constant 0 : i32
    %c0_i32_0 = arith.constant 0 : i32
    %c0_i32_1 = arith.constant 0 : i32
    return %c0_i32, %c0_i32_0 : i32, i32
  }
  func.func @transform_7(%arg0: i32) -> (i32, i32) {
    %c0_i32 = arith.constant 0 : i32
    %c0_i32_0 = arith.constant 0 : i32
    %c0_i32_1 = arith.constant 0 : i32
    return %c0_i32, %c0_i32_0 : i32, i32
  }
  func.func @transform_8(%arg0: i32) -> (i32, i32) {
    %c0_i32 = arith.constant 0 : i32
    %c0_i32_0 = arith.constant 0 : i32
    %c0_i32_1 = arith.constant 0 : i32
    return %c0_i32, %c0_i32_0 : i32, i32
  }
  func.func @transform_9(%arg0: i32) -> (i32, i32) {
    %c0_i32 = arith.constant 0 : i32
    %c0_i32_0 = arith.constant 0 : i32
    %c0_i32_1 = arith.constant 0 : i32
    return %c0_i32, %c0_i32_0 : i32, i32
  }
  func.func @transform_10(%arg0: i32) -> (i32, i32) {
    %c0_i32 = arith.constant 0 : i32
    %c0_i32_0 = arith.constant 0 : i32
    %c0_i32_1 = arith.constant 0 : i32
    return %c0_i32, %c0_i32_0 : i32, i32
  }
  func.func @transform_11(%arg0: i32) -> (i32, i32, i32) {
    %c0_i32 = arith.constant 0 : i32
    %c0_i32_0 = arith.constant 0 : i32
    %c0_i32_1 = arith.constant 0 : i32
    return %arg0, %c0_i32, %c0_i32_0 : i32, i32, i32
  }
}

</mosaic_0001>

<llo_original>
// kernel: tpu_custom_call.1
$region0: #{tpu_custom_call.1}
  #allocation0 [shape = 'u32[]', space=smem, size = 0x4, offset = 0x4, fixed_abs, tag = 'smem constant byte address 0x4 - core index']
  #allocation1 [shape = 'u32[144,128]{1,0:T(1,128)}', space=vmem, size = 0x12000, scoped, tag = 'internal scratch']
  #allocation2 [shape = 'f32[1,1]{1,0:T(1,128)S(1)}', space=vmem, size = 0x200, scoped, tag = 'scoped memory for tpu_custom_call.1']
  %s0 = inlined_call_operand.vmem [shape: f32[1024,2], index: 0, kind: input, shape index: {}]
  %s1 = inlined_call_operand.vmem [shape: f32[2,384], index: 1, kind: input, shape index: {}]
  %s2 = inlined_call_operand.vmem [shape: f32[1,384], index: 2, kind: input, shape index: {}]
  %s3 = inlined_call_operand.vmem [shape: f32[128,128], index: 3, kind: input, shape index: {}]
  %s4 = inlined_call_operand.vmem [shape: f32[1,128], index: 4, kind: input, shape index: {}]
  %s5 = inlined_call_operand.vmem [shape: f32[128,128], index: 5, kind: input, shape index: {}]
  %s6 = inlined_call_operand.vmem [shape: f32[1,128], index: 6, kind: input, shape index: {}]
  %s7 = inlined_call_operand.vmem [shape: f32[128,128], index: 7, kind: input, shape index: {}]
  %s8 = inlined_call_operand.vmem [shape: f32[1,128], index: 8, kind: input, shape index: {}]
  %s9 = inlined_call_operand.vmem [shape: f32[1,128], index: 9, kind: input, shape index: {}]
  %s10 = inlined_call_operand.<no memory space> [shape: f32[1,1], index: 10, kind: input, shape index: {}]
  %s11 = inlined_call_operand.hbm [shape: f32[4,1,256], index: 11, kind: output, shape index: {}]
  %s12 = sld [smem:[#allocation0]]
  $region77: #{tpu_custom_call.1} parent=0
    _
  %s14 = ssub.s32 1, %s12
  %s15 = scalar_select 0, %s14, %s12
  %v16 = vstv %s10
  %17 = vst [vmem:[#allocation2] sm:$0x1] %v16
  $region1: #{tpu_custom_call.1} parent=0
    #allocation3 [shape = 'u8[2048]{0}', space=vmem, size = 0x800, scoped, tag = 'output window, operand 0']
    #allocation4 [shape = 's32[2]{0}', space=sflag, size = 0x8, scoped, tag = 'scoped memory for tpu_custom_call.1']
    %18 = vsyncpa [#allocation4], 0
    %s19 = scalar_lea.sflag [#allocation4], 1
    %20 = vsyncpa %s19, 0
    loop: start=0, step=1, limit=6
    $region2: #{tpu_custom_call.1} parent=1 // loop_pre_header
      _
    $region3: #{tpu_custom_call.1} parent=1 // loop_header
      %s22 = sphi 0, %s26
      %p23 = scmp.ge.s32.totalorder %s22, 6
      %s32 = sphi 0, %s34
      %s35 = sphi 0, %s32
      %s36 = sphi 0, %s35
      %s52 = sphi 0, %s36
      %s56 = sphi 0, %s56
      %s58 = sphi 0, %s56
      %s59 = sphi 0, %s58
      %s73 = sphi 0, %s59
      %s77 = sphi 0, %s77
      %s79 = sphi 0, %s77
      %s80 = sphi 0, %s79
      %s94 = sphi 0, %s80
      %s98 = sphi 0, %s98
      %s100 = sphi 0, %s98
      %s101 = sphi 0, %s100
      %s115 = sphi 0, %s101
      %s119 = sphi 0, %s119
      %s121 = sphi 0, %s119
      %s122 = sphi 0, %s121
      %s136 = sphi 0, %s122
      %s140 = sphi 0, %s140
      %s142 = sphi 0, %s140
      %s143 = sphi 0, %s142
      %s157 = sphi 0, %s143
      %s161 = sphi 0, %s161
      %s163 = sphi 0, %s161
      %s164 = sphi 0, %s163
      %s178 = sphi 0, %s164
      %s182 = sphi 0, %s182
      %s184 = sphi 0, %s182
      %s185 = sphi 0, %s184
      %s199 = sphi 0, %s185
      %s203 = sphi 0, %s203
      %s205 = sphi 0, %s203
      %s206 = sphi 0, %s205
      %s220 = sphi 0, %s206
      %s224 = sphi 0, %s224
      %s226 = sphi 0, %s224
      %s227 = sphi 0, %s226
      %s241 = sphi 0, %s227
      %s245 = sphi 0, %s245
      %s247 = sphi 0, %s245
      %s248 = sphi 0, %s247
      %s262 = sphi 0, %s248
      %s268 = sphi 0, %s270
      %s271 = sphi 0, %s268
      %s272 = sphi 0, %s271
      %s288 = sphi 0, %s272
    $region4: #{tpu_custom_call.1} parent=1 // loop_header_branch
      %25 = sbr.rel (%p23) target = $region8
    $region5: #{tpu_custom_call.1} parent=1 // loop_body
      %s27 = ssub.s32 %s22, 1
      %s28 = ssub.s32 %s22, 2
      %s29 = sadd.s32 %s22, 1
      %s30 = ssub.s32 %s22, %s29
      %p31 = scmp.eq.s32.totalorder %s30, 0
      %s33 = sadd.s32 %s32, 1
      %s34 = scalar_select %p31, %s32, %s33
      %p37 = pneg %p31
      %p38 = scmp.eq.s32.totalorder %s22, 3
      %p39 = por %p37, %p38
      %p40 = scmp.ne.s32.totalorder %s32, %s35
      %p41 = scmp.eq.s32.totalorder %s22, 0
      %p42 = por %p40, %p41
      %p43 = scmp.ne.s32.totalorder %s32, %s35
      %p44 = scmp.eq.s32.totalorder %s27, 3
      %p45 = por %p43, %p44
      %p46 = scmp.ne.s32.totalorder %s35, %s36
      %p47 = scmp.eq.s32.totalorder %s27, 0
      %p48 = por %p46, %p47
      %p49 = scmp.ne.s32.totalorder %s35, %s36
      %p50 = scmp.eq.s32.totalorder %s28, 3
      %p51 = por %p49, %p50
      %p53 = scmp.ne.s32.totalorder %s36, %s52
      %p54 = scmp.eq.s32.totalorder %s28, 0
      %p55 = por %p53, %p54
      %s57 = sadd.s32 %s56, 1
      %p60 = scmp.eq.s32.totalorder %s22, 3
      %p61 = scmp.ne.s32.totalorder %s56, %s58
      %p62 = scmp.eq.s32.totalorder %s22, 0
      %p63 = por %p61, %p62
      %p64 = scmp.ne.s32.totalorder %s56, %s58
      %p65 = scmp.eq.s32.totalorder %s27, 3
      %p66 = por %p64, %p65
      %p67 = scmp.ne.s32.totalorder %s58, %s59
      %p68 = scmp.eq.s32.totalorder %s27, 0
      %p69 = por %p67, %p68
      %p70 = scmp.ne.s32.totalorder %s58, %s59
      %p71 = scmp.eq.s32.totalorder %s28, 3
      %p72 = por %p70, %p71
      %p74 = scmp.ne.s32.totalorder %s59, %s73
      %p75 = scmp.eq.s32.totalorder %s28, 0
      %p76 = por %p74, %p75
      %s78 = sadd.s32 %s77, 1
      %p81 = scmp.eq.s32.totalorder %s22, 3
      %p82 = scmp.ne.s32.totalorder %s77, %s79
      %p83 = scmp.eq.s32.totalorder %s22, 0
      %p84 = por %p82, %p83
      %p85 = scmp.ne.s32.totalorder %s77, %s79
      %p86 = scmp.eq.s32.totalorder %s27, 3
      %p87 = por %p85, %p86
      %p88 = scmp.ne.s32.totalorder %s79, %s80
      %p89 = scmp.eq.s32.totalorder %s27, 0
      %p90 = por %p88, %p89
      %p91 = scmp.ne.s32.totalorder %s79, %s80
      %p92 = scmp.eq.s32.totalorder %s28, 3
      %p93 = por %p91, %p92
      %p95 = scmp.ne.s32.totalorder %s80, %s94
      %p96 = scmp.eq.s32.totalorder %s28, 0
      %p97 = por %p95, %p96
      %s99 = sadd.s32 %s98, 1
      %p102 = scmp.eq.s32.totalorder %s22, 3
      %p103 = scmp.ne.s32.totalorder %s98, %s100
      %p104 = scmp.eq.s32.totalorder %s22, 0
      %p105 = por %p103, %p104
      %p106 = scmp.ne.s32.totalorder %s98, %s100
      %p107 = scmp.eq.s32.totalorder %s27, 3
      %p108 = por %p106, %p107
      %p109 = scmp.ne.s32.totalorder %s100, %s101
      %p110 = scmp.eq.s32.totalorder %s27, 0
      %p111 = por %p109, %p110
      %p112 = scmp.ne.s32.totalorder %s100, %s101
      %p113 = scmp.eq.s32.totalorder %s28, 3
      %p114 = por %p112, %p113
      %p116 = scmp.ne.s32.totalorder %s101, %s115
      %p117 = scmp.eq.s32.totalorder %s28, 0
      %p118 = por %p116, %p117
      %s120 = sadd.s32 %s119, 1
      %p123 = scmp.eq.s32.totalorder %s22, 3
      %p124 = scmp.ne.s32.totalorder %s119, %s121
      %p125 = scmp.eq.s32.totalorder %s22, 0
      %p126 = por %p124, %p125
      %p127 = scmp.ne.s32.totalorder %s119, %s121
      %p128 = scmp.eq.s32.totalorder %s27, 3
      %p129 = por %p127, %p128
      %p130 = scmp.ne.s32.totalorder %s121, %s122
      %p131 = scmp.eq.s32.totalorder %s27, 0
      %p132 = por %p130, %p131
      %p133 = scmp.ne.s32.totalorder %s121, %s122
      %p134 = scmp.eq.s32.totalorder %s28, 3
      %p135 = por %p133, %p134
      %p137 = scmp.ne.s32.totalorder %s122, %s136
      %p138 = scmp.eq.s32.totalorder %s28, 0
      %p139 = por %p137, %p138
      %s141 = sadd.s32 %s140, 1
      %p144 = scmp.eq.s32.totalorder %s22, 3
      %p145 = scmp.ne.s32.totalorder %s140, %s142
      %p146 = scmp.eq.s32.totalorder %s22, 0
      %p147 = por %p145, %p146
      %p148 = scmp.ne.s32.totalorder %s140, %s142
      %p149 = scmp.eq.s32.totalorder %s27, 3
      %p150 = por %p148, %p149
      %p151 = scmp.ne.s32.totalorder %s142, %s143
      %p152 = scmp.eq.s32.totalorder %s27, 0
      %p153 = por %p151, %p152
      %p154 = scmp.ne.s32.totalorder %s142, %s143
      %p155 = scmp.eq.s32.totalorder %s28, 3
      %p156 = por %p154, %p155
      %p158 = scmp.ne.s32.totalorder %s143, %s157
      %p159 = scmp.eq.s32.totalorder %s28, 0
      %p160 = por %p158, %p159
      %s162 = sadd.s32 %s161, 1
      %p165 = scmp.eq.s32.totalorder %s22, 3
      %p166 = scmp.ne.s32.totalorder %s161, %s163
      %p167 = scmp.eq.s32.totalorder %s22, 0
      %p168 = por %p166, %p167
      %p169 = scmp.ne.s32.totalorder %s161, %s163
      %p170 = scmp.eq.s32.totalorder %s27, 3
      %p171 = por %p169, %p170
      %p172 = scmp.ne.s32.totalorder %s163, %s164
      %p173 = scmp.eq.s32.totalorder %s27, 0
      %p174 = por %p172, %p173
      %p175 = scmp.ne.s32.totalorder %s163, %s164
      %p176 = scmp.eq.s32.totalorder %s28, 3
      %p177 = por %p175, %p176
      %p179 = scmp.ne.s32.totalorder %s164, %s178
      %p180 = scmp.eq.s32.totalorder %s28, 0
      %p181 = por %p179, %p180
      %s183 = sadd.s32 %s182, 1
      %p186 = scmp.eq.s32.totalorder %s22, 3
      %p187 = scmp.ne.s32.totalorder %s182, %s184
      %p188 = scmp.eq.s32.totalorder %s22, 0
      %p189 = por %p187, %p188
      %p190 = scmp.ne.s32.totalorder %s182, %s184
      %p191 = scmp.eq.s32.totalorder %s27, 3
      %p192 = por %p190, %p191
      %p193 = scmp.ne.s32.totalorder %s184, %s185
      %p194 = scmp.eq.s32.totalorder %s27, 0
      %p195 = por %p193, %p194
      %p196 = scmp.ne.s32.totalorder %s184, %s185
      %p197 = scmp.eq.s32.totalorder %s28, 3
      %p198 = por %p196, %p197
      %p200 = scmp.ne.s32.totalorder %s185, %s199
      %p201 = scmp.eq.s32.totalorder %s28, 0
      %p202 = por %p200, %p201
      %s204 = sadd.s32 %s203, 1
      %p207 = scmp.eq.s32.totalorder %s22, 3
      %p208 = scmp.ne.s32.totalorder %s203, %s205
      %p209 = scmp.eq.s32.totalorder %s22, 0
      %p210 = por %p208, %p209
      %p211 = scmp.ne.s32.totalorder %s203, %s205
      %p212 = scmp.eq.s32.totalorder %s27, 3
      %p213 = por %p211, %p212
      %p214 = scmp.ne.s32.totalorder %s205, %s206
      %p215 = scmp.eq.s32.totalorder %s27, 0
      %p216 = por %p214, %p215
      %p217 = scmp.ne.s32.totalorder %s205, %s206
      %p218 = scmp.eq.s32.totalorder %s28, 3
      %p219 = por %p217, %p218
      %p221 = scmp.ne.s32.totalorder %s206, %s220
      %p222 = scmp.eq.s32.totalorder %s28, 0
      %p223 = por %p221, %p222
      %s225 = sadd.s32 %s224, 1
      %p228 = scmp.eq.s32.totalorder %s22, 3
      %p229 = scmp.ne.s32.totalorder %s224, %s226
      %p230 = scmp.eq.s32.totalorder %s22, 0
      %p231 = por %p229, %p230
      %p232 = scmp.ne.s32.totalorder %s224, %s226
      %p233 = scmp.eq.s32.totalorder %s27, 3
      %p234 = por %p232, %p233
      %p235 = scmp.ne.s32.totalorder %s226, %s227
      %p236 = scmp.eq.s32.totalorder %s27, 0
      %p237 = por %p235, %p236
      %p238 = scmp.ne.s32.totalorder %s226, %s227
      %p239 = scmp.eq.s32.totalorder %s28, 3
      %p240 = por %p238, %p239
      %p242 = scmp.ne.s32.totalorder %s227, %s241
      %p243 = scmp.eq.s32.totalorder %s28, 0
      %p244 = por %p242, %p243
      %s246 = sadd.s32 %s245, 1
      %p249 = scmp.eq.s32.totalorder %s22, 3
      %p250 = scmp.ne.s32.totalorder %s245, %s247
      %p251 = scmp.eq.s32.totalorder %s22, 0
      %p252 = por %p250, %p251
      %p253 = scmp.ne.s32.totalorder %s245, %s247
      %p254 = scmp.eq.s32.totalorder %s27, 3
      %p255 = por %p253, %p254
      %p256 = scmp.ne.s32.totalorder %s247, %s248
      %p257 = scmp.eq.s32.totalorder %s27, 0
      %p258 = por %p256, %p257
      %p259 = scmp.ne.s32.totalorder %s247, %s248
      %p260 = scmp.eq.s32.totalorder %s28, 3
      %p261 = por %p259, %p260
      %p263 = scmp.ne.s32.totalorder %s248, %s262
      %p264 = scmp.eq.s32.totalorder %s28, 0
      %p265 = por %p263, %p264
      %s266 = ssub.s32 %s22, %s29
      %p267 = scmp.eq.s32.totalorder %s266, 0
      %s269 = sadd.s32 %s268, 1
      %s270 = scalar_select %p267, %s268, %s269
      %p273 = pneg %p267
      %p274 = scmp.eq.s32.totalorder %s22, 3
      %p275 = por %p273, %p274
      %p276 = scmp.ne.s32.totalorder %s268, %s271
      %p277 = scmp.eq.s32.totalorder %s22, 0
      %p278 = por %p276, %p277
      %p279 = scmp.ne.s32.totalorder %s268, %s271
      %p280 = scmp.eq.s32.totalorder %s27, 3
      %p281 = por %p279, %p280
      %p282 = scmp.ne.s32.totalorder %s271, %s272
      %p283 = scmp.eq.s32.totalorder %s27, 0
      %p284 = por %p282, %p283
      %p285 = scmp.ne.s32.totalorder %s271, %s272
      %p286 = scmp.eq.s32.totalorder %s28, 3
      %p287 = por %p285, %p286
      %p289 = scmp.ne.s32.totalorder %s272, %s288
      %p290 = scmp.eq.s32.totalorder %s28, 0
      %p291 = por %p289, %p290
      %p292 = scmp.le.s32.totalorder 1, %s22
      %p293 = scmp.lt.s32.totalorder %s22, 5
      %p294 = pnand %p292, %p293
      %p295 = pneg %p294
      // Predicated region
      $region9: #{tpu_custom_call.1} parent=5 // pred_check
        _
      $region10: #{tpu_custom_call.1} parent=5 // pred_check_branch
        %297 = sbr.rel (%p294) target = $region12
      $region11: #{tpu_custom_call.1} parent=5 // pred_region
        %s298 = ssub.s32 %s22, 1
        // Predicated region
        $region13: #{tpu_custom_call.1} parent=11 // pred_check
          %p299 = pneg %p69
        $region14: #{tpu_custom_call.1} parent=11 // pred_check_branch
          %301 = sbr.rel (%p299) target = $region16
        $region15: #{tpu_custom_call.1} parent=11 // pred_region
          _
        $region16: #{tpu_custom_call.1} parent=11 // pred_fallthru
          _
        // Predicated region
        $region17: #{tpu_custom_call.1} parent=11 // pred_check
          %p302 = pneg %p90
        $region18: #{tpu_custom_call.1} parent=11 // pred_check_branch
          %304 = sbr.rel (%p302) target = $region20
        $region19: #{tpu_custom_call.1} parent=11 // pred_region
          _
        $region20: #{tpu_custom_call.1} parent=11 // pred_fallthru
          _
        // Predicated region
        $region21: #{tpu_custom_call.1} parent=11 // pred_check
          %p305 = pneg %p111
        $region22: #{tpu_custom_call.1} parent=11 // pred_check_branch
          %307 = sbr.rel (%p305) target = $region24
        $region23: #{tpu_custom_call.1} parent=11 // pred_region
          _
        $region24: #{tpu_custom_call.1} parent=11 // pred_fallthru
          _
        // Predicated region
        $region25: #{tpu_custom_call.1} parent=11 // pred_check
          %p308 = pneg %p132
        $region26: #{tpu_custom_call.1} parent=11 // pred_check_branch
          %310 = sbr.rel (%p308) target = $region28
        $region27: #{tpu_custom_call.1} parent=11 // pred_region
          _
        $region28: #{tpu_custom_call.1} parent=11 // pred_fallthru
          _
        // Predicated region
        $region29: #{tpu_custom_call.1} parent=11 // pred_check
          %p311 = pneg %p153
        $region30: #{tpu_custom_call.1} parent=11 // pred_check_branch
          %313 = sbr.rel (%p311) target = $region32
        $region31: #{tpu_custom_call.1} parent=11 // pred_region
          _
        $region32: #{tpu_custom_call.1} parent=11 // pred_fallthru
          _
        // Predicated region
        $region33: #{tpu_custom_call.1} parent=11 // pred_check
          %p314 = pneg %p174
        $region34: #{tpu_custom_call.1} parent=11 // pred_check_branch
          %316 = sbr.rel (%p314) target = $region36
        $region35: #{tpu_custom_call.1} parent=11 // pred_region
          _
        $region36: #{tpu_custom_call.1} parent=11 // pred_fallthru
          _
        // Predicated region
        $region37: #{tpu_custom_call.1} parent=11 // pred_check
          %p317 = pneg %p195
        $region38: #{tpu_custom_call.1} parent=11 // pred_check_branch
          %319 = sbr.rel (%p317) target = $region40
        $region39: #{tpu_custom_call.1} parent=11 // pred_region
          _
        $region40: #{tpu_custom_call.1} parent=11 // pred_fallthru
          _
        // Predicated region
        $region41: #{tpu_custom_call.1} parent=11 // pred_check
          %p320 = pneg %p216
        $region42: #{tpu_custom_call.1} parent=11 // pred_check_branch
          %322 = sbr.rel (%p320) target = $region44
        $region43: #{tpu_custom_call.1} parent=11 // pred_region
          _
        $region44: #{tpu_custom_call.1} parent=11 // pred_fallthru
          _
        // Predicated region
        $region45: #{tpu_custom_call.1} parent=11 // pred_check
          %p323 = pneg %p237
        $region46: #{tpu_custom_call.1} parent=11 // pred_check_branch
          %325 = sbr.rel (%p323) target = $region48
        $region47: #{tpu_custom_call.1} parent=11 // pred_region
          _
        $region48: #{tpu_custom_call.1} parent=11 // pred_fallthru
          _
        // Predicated region
        $region49: #{tpu_custom_call.1} parent=11 // pred_check
          %p326 = pneg %p258
        $region50: #{tpu_custom_call.1} parent=11 // pred_check_branch
          %328 = sbr.rel (%p326) target = $region52
        $region51: #{tpu_custom_call.1} parent=11 // pred_region
          _
        $region52: #{tpu_custom_call.1} parent=11 // pred_fallthru
          _
      $region12: #{tpu_custom_call.1} parent=5 // pred_fallthru
        _
      %p329 = scmp.lt.s32.totalorder %s22, 4
      // Predicated region
      $region53: #{tpu_custom_call.1} parent=5 // pred_check
        %p330 = pneg %p329
      $region54: #{tpu_custom_call.1} parent=5 // pred_check_branch
        %332 = sbr.rel (%p330) target = $region56
      $region55: #{tpu_custom_call.1} parent=5 // pred_region
        // Predicated region
        $region57: #{tpu_custom_call.1} parent=55 // pred_check
          %p333 = pneg %p42
        $region58: #{tpu_custom_call.1} parent=55 // pred_check_branch
          %335 = sbr.rel (%p333) target = $region60
        $region59: #{tpu_custom_call.1} parent=55 // pred_region
          %s336 = smul.u32 32, %s22
          %p337 = scmp.lt.s32.totalorder %s336, 127
          %s338 = scalar_select %p337, %s336, 127
          %s339 = smul.addr %s338, 8
          %s340 = scalar_lea.vmem %s0, %s339
          %s341 = smul.u32 32, %s22
        $region60: #{tpu_custom_call.1} parent=55 // pred_fallthru
          _
      $region56: #{tpu_custom_call.1} parent=5 // pred_fallthru
        _
      %p342 = scmp.le.s32.totalorder 1, %s22
      %p343 = scmp.lt.s32.totalorder %s22, 5
      %p344 = pnand %p342, %p343
      %p345 = pneg %p344
      // Predicated region
      $region61: #{tpu_custom_call.1} parent=5 // pred_check
        _
      $region62: #{tpu_custom_call.1} parent=5 // pred_check_branch
        %347 = sbr.rel (%p344) target = $region64
      $region63: #{tpu_custom_call.1} parent=5 // pred_region
        %s348 = ssub.s32 %s22, 1
        %s349 = smul.u32 32, %s27
        %p350 = scmp.lt.s32.totalorder %s349, 127
        %s351 = scalar_select %p350, %s349, 127
        %s352 = smul.addr %s351, 8
        %s353 = scalar_lea.vmem %s0, %s352
        %p354 = pneg %p48
        %p355 = pneg %p45
        %p356 = pneg %p69
        %p357 = pneg %p66
        %p358 = pneg %p90
        %p359 = pneg %p87
        %p360 = pneg %p111
        %p361 = pneg %p108
        %p362 = pneg %p132
        %p363 = pneg %p129
        %p364 = pneg %p153
        %p365 = pneg %p150
        %p366 = pneg %p174
        %p367 = pneg %p171
        %p368 = pneg %p195
        %p369 = pneg %p192
        %p370 = pneg %p216
        %p371 = pneg %p213
        %p372 = pneg %p237
        %p373 = pneg %p234
        %p374 = pneg %p258
        %p375 = pneg %p255
        %p376 = pneg %p284
        %p377 = pneg %p281
        %s378 = sand.u32 %s271, 1
        %s379 = scalar_lea.sflag [#allocation4], %s378
        %s380 = sand.u32 %s271, 1
        %s381 = smul.addr %s380, 2
        %s382 = scalar_lea.vmem [#allocation3], %s381
        %s383 = smul.u32 32, %s27
        %p384 = scmp.lt.s32.totalorder %s383, 127
        %s385 = scalar_select %p384, %s383, 127
        %s386 = smul.addr %s385, 8
        %s387 = scalar_lea.vmem %s0, %s386
        %s388 = smul.u32 32, %s27
        %v389 = vld [vmem:[%s387] sm:$0xff]
        %v390 = vld [vmem:[%s387 + $0x8] sm:$0xff]
        %v391 = vld [vmem:[%s387 + $0x10] sm:$0xff]
        %v392 = vld [vmem:[%s387 + $0x18] sm:$0xff]
        %v393 = vld [vmem:[%s387 + $0x20] sm:$0xff]
        %v394 = vld [vmem:[%s387 + $0x28] sm:$0xff]
        %v395 = vld [vmem:[%s387 + $0x30] sm:$0xff]
        %v396 = vld [vmem:[%s387 + $0x38] sm:$0xff]
        %v397 = vld [vmem:[%s387 + $0x40] sm:$0xff]
        %v398 = vld [vmem:[%s387 + $0x48] sm:$0xff]
        %v399 = vld [vmem:[%s387 + $0x50] sm:$0xff]
        %v400 = vld [vmem:[%s387 + $0x58] sm:$0xff]
        %v401 = vld [vmem:[%s387 + $0x60] sm:$0xff]
        %v402 = vld [vmem:[%s387 + $0x68] sm:$0xff]
        %v403 = vld [vmem:[%s387 + $0x70] sm:$0xff]
        %v404 = vld [vmem:[%s387 + $0x78] sm:$0xff]
        %v405 = vld [vmem:[%s387 + $0x80] sm:$0xff]
        %v406 = vld [vmem:[%s387 + $0x88] sm:$0xff]
        %v407 = vld [vmem:[%s387 + $0x90] sm:$0xff]
        %v408 = vld [vmem:[%s387 + $0x98] sm:$0xff]
        %v409 = vld [vmem:[%s387 + $0xa0] sm:$0xff]
        %v410 = vld [vmem:[%s387 + $0xa8] sm:$0xff]
        %v411 = vld [vmem:[%s387 + $0xb0] sm:$0xff]
        %v412 = vld [vmem:[%s387 + $0xb8] sm:$0xff]
        %v413 = vld [vmem:[%s387 + $0xc0] sm:$0xff]
        %v414 = vld [vmem:[%s387 + $0xc8] sm:$0xff]
        %v415 = vld [vmem:[%s387 + $0xd0] sm:$0xff]
        %v416 = vld [vmem:[%s387 + $0xd8] sm:$0xff]
        %v417 = vld [vmem:[%s387 + $0xe0] sm:$0xff]
        %v418 = vld [vmem:[%s387 + $0xe8] sm:$0xff]
        %v419 = vld [vmem:[%s387 + $0xf0] sm:$0xff]
        %v420 = vld [vmem:[%s387 + $0xf8] sm:$0xff]
        %v421 = vld [vmem:[%s1] sm:$0x3f]
        %v422 = vld [vmem:[%s2] sm:$0x7]
        %v424 = vlaneseq
        %v425 = vshrl.u32 %v424, 7
        %v426 = vsub.s32 0, %v425
        %v427 = vrot.slane %v422, %v426
        %v428 = vlaneseq
        %v429 = vshrl.u32 %v428, 7
        %v430 = vsub.s32 1, %v429
        %v431 = vrot.slane %v422, %v430
        %v432 = vlaneseq
        %v433 = vshrl.u32 %v432, 7
        %v434 = vsub.s32 2, %v433
        %v435 = vrot.slane %v422, %v434
        %v440 = vcombine.high %v421, %v421
        %v442 = vunpack.c.l.s4 1983009808
        %v443 = vunpack.c.0.s8 %v442
        %v444 = vlaneseq
        %v445 = vshrl.u32 %v444, 7
        %v446 = vsub.s32 %v443, %v445
        %v447 = vrot.slane %v421, %v446
        %v449 = vunpack.c.l.s4 1983009808
        %v450 = vunpack.c.0.s8 %v449
        %v451 = vlaneseq
        %v452 = vshrl.u32 %v451, 7
        %v453 = vsub.s32 %v450, %v452
        %v454 = vrot.slane %v440, %v453
        %v455 = vcombine.high %v447, %v447
        %vm456 = vcmask 15360
        %v458 = vsel %vm456, %v389, 0
        %v461 = vsel %vm456, %v390, 0
        %v464 = vsel %vm456, %v391, 0
        %v467 = vsel %vm456, %v392, 0
        %v470 = vsel %vm456, %v393, 0
        %v473 = vsel %vm456, %v394, 0
        %v476 = vsel %vm456, %v395, 0
        %v479 = vsel %vm456, %v396, 0
        %v482 = vsel %vm456, %v397, 0
        %v485 = vsel %vm456, %v398, 0
        %v488 = vsel %vm456, %v399, 0
        %v491 = vsel %vm456, %v400, 0
        %v494 = vsel %vm456, %v401, 0
        %v497 = vsel %vm456, %v402, 0
        %v500 = vsel %vm456, %v403, 0
        %v503 = vsel %vm456, %v404, 0
        %v506 = vsel %vm456, %v405, 0
        %v509 = vsel %vm456, %v406, 0
        %v512 = vsel %vm456, %v407, 0
        %v515 = vsel %vm456, %v408, 0
        %v518 = vsel %vm456, %v409, 0
        %v521 = vsel %vm456, %v410, 0
        %v524 = vsel %vm456, %v411, 0
        %v527 = vsel %vm456, %v412, 0
        %v530 = vsel %vm456, %v413, 0
        %v533 = vsel %vm456, %v414, 0
        %v536 = vsel %vm456, %v415, 0
        %v539 = vsel %vm456, %v416, 0
        %v542 = vsel %vm456, %v417, 0
        %v545 = vsel %vm456, %v418, 0
        %v548 = vsel %vm456, %v419, 0
        %v551 = vsel %vm456, %v420, 0
        %vm553 = vcmask 1041408
        %v554 = vsel %vm553, %v447, 0
        %v556 = vsel %vm553, %v455, 0
        %v558 = vsel %vm553, %v454, 0
        %560 = vmatprep.subr.mxu0 %v556
        %561 = vmatpush1.msra.mxu0 %v554
        %562 = vmatprep.subr.mxu0 0.0
        %563 = vmatpush1.msra.mxu0 0.0
        %564 = vmatprep.subr.mxu0 0.0
        %565 = vmatpush1.msra.mxu0 0.0
        %566 = vmatprep.subr.mxu0 0.0
        %567 = vmatpush1.msra.mxu0 0.0
        %568 = vmatprep.subr.mxu0 0.0
        %569 = vmatpush1.msra.mxu0 0.0
        %570 = vmatprep.subr.mxu0 0.0
        %571 = vmatpush1.msra.mxu0 0.0
        %572 = vmatprep.subr.mxu0 0.0
        %573 = vmatpush1.msra.mxu0 0.0
        %574 = vmatprep.subr.mxu0 0.0
        %575 = vmatpush1.msra.mxu0 0.0
        %576 = vmatprep.subr.mxu0 0.0
        %577 = vmatpush1.msra.mxu0 0.0
        %578 = vmatprep.subr.mxu0 0.0
        %579 = vmatpush1.msra.mxu0 0.0
        %580 = vmatprep.subr.mxu0 0.0
        %581 = vmatpush1.msra.mxu0 0.0
        %582 = vmatprep.subr.mxu0 0.0
        %583 = vmatpush1.msra.mxu0 0.0
        %584 = vmatprep.subr.mxu0 0.0
        %585 = vmatpush1.msra.mxu0 0.0
        %586 = vmatprep.subr.mxu0 0.0
        %587 = vmatpush1.msra.mxu0 0.0
        %588 = vmatprep.subr.mxu0 0.0
        %589 = vmatpush1.msra.mxu0 0.0
        %590 = vmatprep.subr.mxu0 0.0
        %591 = vmatpush1.msra.mxu0 0.0
        %592 = vmatprep.subr.mxu0 0.0
        %593 = vmatpush1.msra.mxu0 0.0
        %594 = vmatprep.subr.mxu0 0.0
        %595 = vmatpush1.msra.mxu0 0.0
        %596 = vmatprep.subr.mxu0 0.0
        %597 = vmatpush1.msra.mxu0 0.0
        %598 = vmatprep.subr.mxu0 0.0
        %599 = vmatpush1.msra.mxu0 0.0
        %600 = vmatprep.subr.mxu0 0.0
        %601 = vmatpush1.msra.mxu0 0.0
        %602 = vmatprep.subr.mxu0 0.0
        %603 = vmatpush1.msra.mxu0 0.0
        %604 = vmatprep.subr.mxu0 0.0
        %605 = vmatpush1.msra.mxu0 0.0
        %606 = vmatprep.subr.mxu0 0.0
        %607 = vmatpush1.msra.mxu0 0.0
        %608 = vmatprep.subr.mxu0 0.0
        %609 = vmatpush1.msra.mxu0 0.0
        %610 = vmatprep.subr.mxu0 0.0
        %611 = vmatpush1.msra.mxu0 0.0
        %612 = vmatprep.subr.mxu0 0.0
        %613 = vmatpush1.msra.mxu0 0.0
        %614 = vmatprep.subr.mxu0 0.0
        %615 = vmatpush1.msra.mxu0 0.0
        %616 = vmatprep.subr.mxu0 0.0
        %617 = vmatpush1.msra.mxu0 0.0
        %618 = vmatprep.subr.mxu0 0.0
        %619 = vmatpush1.msra.mxu0 0.0
        %620 = vmatprep.subr.mxu0 0.0
        %621 = vmatpush1.msra.mxu0 0.0
        %622 = vmatprep.subr.mxu0 0.0
        %623 = vmatpush1.msra.mxu0 0.0
        %624 = vmatprep.mubr.f32.mxu0 0.0
        %625 = vmatmul.mubr.f32.gmra.mrb[0].mxu0 %v458
        %v626 = vpop.f32.mrb[0].mxu0
        %v627 = vadd.f32 %v427, %v626
        %v628 = vpop.f32.mrb[0].mxu0
        %v629 = vadd.f32 %v431, %v628
        %630 = vmatprep.mubr.f32.mxu0 0.0
        %631 = vmatmul.mubr.f32.gmra.mrb[0].mxu0 %v461
        %v632 = vpop.f32.mrb[0].mxu0
        %v633 = vadd.f32 %v427, %v632
        %v634 = vpop.f32.mrb[0].mxu0
        %v635 = vadd.f32 %v431, %v634
        %636 = vmatprep.mubr.f32.mxu0 0.0
        %637 = vmatmul.mubr.f32.gmra.mrb[0].mxu0 %v464
        %v638 = vpop.f32.mrb[0].mxu0
        %v639 = vadd.f32 %v427, %v638
        %v640 = vpop.f32.mrb[0].mxu0
        %v641 = vadd.f32 %v431, %v640
        %642 = vmatprep.mubr.f32.mxu0 0.0
        %643 = vmatmul.mubr.f32.gmra.mrb[0].mxu0 %v467
        %v644 = vpop.f32.mrb[0].mxu0
        %v645 = vadd.f32 %v427, %v644
        %v646 = vpop.f32.mrb[0].mxu0
        %v647 = vadd.f32 %v431, %v646
        %648 = vmatprep.mubr.f32.mxu0 0.0
        %649 = vmatmul.mubr.f32.gmra.mrb[0].mxu0 %v470
        %v650 = vpop.f32.mrb[0].mxu0
        %v651 = vadd.f32 %v427, %v650
        %v652 = vpop.f32.mrb[0].mxu0
        %v653 = vadd.f32 %v431, %v652
        %654 = vmatprep.mubr.f32.mxu0 0.0
        %655 = vmatmul.mubr.f32.gmra.mrb[0].mxu0 %v473
        %v656 = vpop.f32.mrb[0].mxu0
        %v657 = vadd.f32 %v427, %v656
        %v658 = vpop.f32.mrb[0].mxu0
        %v659 = vadd.f32 %v431, %v658
        %660 = vmatprep.mubr.f32.mxu0 0.0
        %661 = vmatmul.mubr.f32.gmra.mrb[0].mxu0 %v476
        %v662 = vpop.f32.mrb[0].mxu0
        %v663 = vadd.f32 %v427, %v662
        %v664 = vpop.f32.mrb[0].mxu0
        %v665 = vadd.f32 %v431, %v664
        %666 = vmatprep.mubr.f32.mxu0 0.0
        %667 = vmatmul.mubr.f32.gmra.mrb[0].mxu0 %v479
        %v668 = vpop.f32.mrb[0].mxu0
        %v669 = vadd.f32 %v427, %v668
        %v670 = vpop.f32.mrb[0].mxu0
        %v671 = vadd.f32 %v431, %v670
        %672 = vmatprep.mubr.f32.mxu0 0.0
        %673 = vmatmul.mubr.f32.gmra.mrb[0].mxu0 %v482
        %v674 = vpop.f32.mrb[0].mxu0
        %v675 = vadd.f32 %v427, %v674
        %v676 = vpop.f32.mrb[0].mxu0
        %v677 = vadd.f32 %v431, %v676
        %678 = vmatprep.mubr.f32.mxu0 0.0
        %679 = vmatmul.mubr.f32.gmra.mrb[0].mxu0 %v485
        %v680 = vpop.f32.mrb[0].mxu0
        %v681 = vadd.f32 %v427, %v680
        %v682 = vpop.f32.mrb[0].mxu0
        %v683 = vadd.f32 %v431, %v682
        %684 = vmatprep.mubr.f32.mxu0 0.0
        %685 = vmatmul.mubr.f32.gmra.mrb[0].mxu0 %v488
        %v686 = vpop.f32.mrb[0].mxu0
        %v687 = vadd.f32 %v427, %v686
        %v688 = vpop.f32.mrb[0].mxu0
        %v689 = vadd.f32 %v431, %v688
        %690 = vmatprep.mubr.f32.mxu0 0.0
        %691 = vmatmul.mubr.f32.gmra.mrb[0].mxu0 %v491
        %v692 = vpop.f32.mrb[0].mxu0
        %v693 = vadd.f32 %v427, %v692
        %v694 = vpop.f32.mrb[0].mxu0
        %v695 = vadd.f32 %v431, %v694
        %696 = vmatprep.mubr.f32.mxu0 0.0
        %697 = vmatmul.mubr.f32.gmra.mrb[0].mxu0 %v494
        %v698 = vpop.f32.mrb[0].mxu0
        %v699 = vadd.f32 %v427, %v698
        %v700 = vpop.f32.mrb[0].mxu0
        %v701 = vadd.f32 %v431, %v700
        %702 = vmatprep.mubr.f32.mxu0 0.0
        %703 = vmatmul.mubr.f32.gmra.mrb[0].mxu0 %v497
        %v704 = vpop.f32.mrb[0].mxu0
        %v705 = vadd.f32 %v427, %v704
        %v706 = vpop.f32.mrb[0].mxu0
        %v707 = vadd.f32 %v431, %v706
        %708 = vmatprep.mubr.f32.mxu0 0.0
        %709 = vmatmul.mubr.f32.gmra.mrb[0].mxu0 %v500
        %v710 = vpop.f32.mrb[0].mxu0
        %v711 = vadd.f32 %v427, %v710
        %v712 = vpop.f32.mrb[0].mxu0
        %v713 = vadd.f32 %v431, %v712
        %714 = vmatprep.mubr.f32.mxu0 0.0
        %715 = vmatmul.mubr.f32.gmra.mrb[0].mxu0 %v503
        %v716 = vpop.f32.mrb[0].mxu0
        %v717 = vadd.f32 %v427, %v716
        %v718 = vpop.f32.mrb[0].mxu0
        %v719 = vadd.f32 %v431, %v718
        %720 = vmatprep.mubr.f32.mxu0 0.0
        %721 = vmatmul.mubr.f32.gmra.mrb[0].mxu0 %v506
        %v722 = vpop.f32.mrb[0].mxu0
        %v723 = vadd.f32 %v427, %v722
        %v724 = vpop.f32.mrb[0].mxu0
        %v725 = vadd.f32 %v431, %v724
        %726 = vmatprep.mubr.f32.mxu0 0.0
        %727 = vmatmul.mubr.f32.gmra.mrb[0].mxu0 %v509
        %v728 = vpop.f32.mrb[0].mxu0
        %v729 = vadd.f32 %v427, %v728
        %v730 = vpop.f32.mrb[0].mxu0
        %v731 = vadd.f32 %v431, %v730
        %732 = vmatprep.mubr.f32.mxu0 0.0
        %733 = vmatmul.mubr.f32.gmra.mrb[0].mxu0 %v512
        %v734 = vpop.f32.mrb[0].mxu0
        %v735 = vadd.f32 %v427, %v734
        %v736 = vpop.f32.mrb[0].mxu0
        %v737 = vadd.f32 %v431, %v736
        %738 = vmatprep.mubr.f32.mxu0 0.0
        %739 = vmatmul.mubr.f32.gmra.mrb[0].mxu0 %v515
        %v740 = vpop.f32.mrb[0].mxu0
        %v741 = vadd.f32 %v427, %v740
        %v742 = vpop.f32.mrb[0].mxu0
        %v743 = vadd.f32 %v431, %v742
        %744 = vmatprep.mubr.f32.mxu0 0.0
        %745 = vmatmul.mubr.f32.gmra.mrb[0].mxu0 %v518
        %v746 = vpop.f32.mrb[0].mxu0
        %v747 = vadd.f32 %v427, %v746
        %v748 = vpop.f32.mrb[0].mxu0
        %v749 = vadd.f32 %v431, %v748
        %750 = vmatprep.mubr.f32.mxu0 0.0
        %751 = vmatmul.mubr.f32.gmra.mrb[0].mxu0 %v521
        %v752 = vpop.f32.mrb[0].mxu0
        %v753 = vadd.f32 %v427, %v752
        %v754 = vpop.f32.mrb[0].mxu0
        %v755 = vadd.f32 %v431, %v754
        %756 = vmatprep.mubr.f32.mxu0 0.0
        %757 = vmatmul.mubr.f32.gmra.mrb[0].mxu0 %v524
        %v758 = vpop.f32.mrb[0].mxu0
        %v759 = vadd.f32 %v427, %v758
        %v760 = vpop.f32.mrb[0].mxu0
        %v761 = vadd.f32 %v431, %v760
        %762 = vmatprep.mubr.f32.mxu0 0.0
        %763 = vmatmul.mubr.f32.gmra.mrb[0].mxu0 %v527
        %v764 = vpop.f32.mrb[0].mxu0
        %v765 = vadd.f32 %v427, %v764
        %v766 = vpop.f32.mrb[0].mxu0
        %v767 = vadd.f32 %v431, %v766
        %768 = vmatprep.mubr.f32.mxu0 0.0
        %769 = vmatmul.mubr.f32.gmra.mrb[0].mxu0 %v530
        %v770 = vpop.f32.mrb[0].mxu0
        %v771 = vadd.f32 %v427, %v770
        %v772 = vpop.f32.mrb[0].mxu0
        %v773 = vadd.f32 %v431, %v772
        %774 = vmatprep.mubr.f32.mxu0 0.0
        %775 = vmatmul.mubr.f32.gmra.mrb[0].mxu0 %v533
        %v776 = vpop.f32.mrb[0].mxu0
        %v777 = vadd.f32 %v427, %v776
        %v778 = vpop.f32.mrb[0].mxu0
        %v779 = vadd.f32 %v431, %v778
        %780 = vmatprep.mubr.f32.mxu0 0.0
        %781 = vmatmul.mubr.f32.gmra.mrb[0].mxu0 %v536
        %v782 = vpop.f32.mrb[0].mxu0
        %v783 = vadd.f32 %v427, %v782
        %v784 = vpop.f32.mrb[0].mxu0
        %v785 = vadd.f32 %v431, %v784
        %786 = vmatprep.mubr.f32.mxu0 0.0
        %787 = vmatmul.mubr.f32.gmra.mrb[0].mxu0 %v539
        %v788 = vpop.f32.mrb[0].mxu0
        %v789 = vadd.f32 %v427, %v788
        %v790 = vpop.f32.mrb[0].mxu0
        %v791 = vadd.f32 %v431, %v790
        %792 = vmatprep.mubr.f32.mxu0 0.0
        %793 = vmatmul.mubr.f32.gmra.mrb[0].mxu0 %v542
        %v794 = vpop.f32.mrb[0].mxu0
        %v795 = vadd.f32 %v427, %v794
        %v796 = vpop.f32.mrb[0].mxu0
        %v797 = vadd.f32 %v431, %v796
        %798 = vmatprep.mubr.f32.mxu0 0.0
        %799 = vmatmul.mubr.f32.gmra.mrb[0].mxu0 %v545
        %v800 = vpop.f32.mrb[0].mxu0
        %v801 = vadd.f32 %v427, %v800
        %v802 = vpop.f32.mrb[0].mxu0
        %v803 = vadd.f32 %v431, %v802
        %804 = vmatprep.mubr.f32.mxu0 0.0
        %805 = vmatmul.mubr.f32.gmra.mrb[0].mxu0 %v548
        %v806 = vpop.f32.mrb[0].mxu0
        %v807 = vadd.f32 %v427, %v806
        %v808 = vpop.f32.mrb[0].mxu0
        %v809 = vadd.f32 %v431, %v808
        %810 = vmatprep.mubr.f32.mxu0 0.0
        %811 = vmatmul.mubr.f32.gmra.mrb[0].mxu0 %v551
        %v812 = vpop.f32.mrb[0].mxu0
        %v813 = vadd.f32 %v427, %v812
        %v814 = vpop.f32.mrb[0].mxu0
        %v815 = vadd.f32 %v431, %v814
        %816 = vdwg.mxu0
        %817 = vmatprep.subr.mxu0 0.0
        %818 = vmatpush1.msra.mxu0 %v558
        %819 = vmatprep.subr.mxu0 0.0
        %820 = vmatpush1.msra.mxu0 0.0
        %821 = vmatprep.subr.mxu0 0.0
        %822 = vmatpush1.msra.mxu0 0.0
        %823 = vmatprep.subr.mxu0 0.0
        %824 = vmatpush1.msra.mxu0 0.0
        %825 = vmatprep.subr.mxu0 0.0
        %826 = vmatpush1.msra.mxu0 0.0
        %827 = vmatprep.subr.mxu0 0.0
        %828 = vmatpush1.msra.mxu0 0.0
        %829 = vmatprep.subr.mxu0 0.0
        %830 = vmatpush1.msra.mxu0 0.0
        %831 = vmatprep.subr.mxu0 0.0
        %832 = vmatpush1.msra.mxu0 0.0
        %833 = vmatprep.subr.mxu0 0.0
        %834 = vmatpush1.msra.mxu0 0.0
        %835 = vmatprep.subr.mxu0 0.0
        %836 = vmatpush1.msra.mxu0 0.0
        %837 = vmatprep.subr.mxu0 0.0
        %838 = vmatpush1.msra.mxu0 0.0
        %839 = vmatprep.subr.mxu0 0.0
        %840 = vmatpush1.msra.mxu0 0.0
        %841 = vmatprep.subr.mxu0 0.0
        %842 = vmatpush1.msra.mxu0 0.0
        %843 = vmatprep.subr.mxu0 0.0
        %844 = vmatpush1.msra.mxu0 0.0
        %845 = vmatprep.subr.mxu0 0.0
        %846 = vmatpush1.msra.mxu0 0.0
        %847 = vmatprep.subr.mxu0 0.0
        %848 = vmatpush1.msra.mxu0 0.0
        %849 = vmatprep.subr.mxu0 0.0
        %850 = vmatpush1.msra.mxu0 0.0
        %851 = vmatprep.subr.mxu0 0.0
        %852 = vmatpush1.msra.mxu0 0.0
        %853 = vmatprep.subr.mxu0 0.0
        %854 = vmatpush1.msra.mxu0 0.0
        %855 = vmatprep.subr.mxu0 0.0
        %856 = vmatpush1.msra.mxu0 0.0
        %857 = vmatprep.subr.mxu0 0.0
        %858 = vmatpush1.msra.mxu0 0.0
        %859 = vmatprep.subr.mxu0 0.0
        %860 = vmatpush1.msra.mxu0 0.0
        %861 = vmatprep.subr.mxu0 0.0
        %862 = vmatpush1.msra.mxu0 0.0
        %863 = vmatprep.subr.mxu0 0.0
        %864 = vmatpush1.msra.mxu0 0.0
        %865 = vmatprep.subr.mxu0 0.0
        %866 = vmatpush1.msra.mxu0 0.0
        %867 = vmatprep.subr.mxu0 0.0
        %868 = vmatpush1.msra.mxu0 0.0
        %869 = vmatprep.subr.mxu0 0.0
        %870 = vmatpush1.msra.mxu0 0.0
        %871 = vmatprep.subr.mxu0 0.0
        %872 = vmatpush1.msra.mxu0 0.0
        %873 = vmatprep.subr.mxu0 0.0
        %874 = vmatpush1.msra.mxu0 0.0
        %875 = vmatprep.subr.mxu0 0.0
        %876 = vmatpush1.msra.mxu0 0.0
        %877 = vmatprep.subr.mxu0 0.0
        %878 = vmatpush1.msra.mxu0 0.0
        %879 = vmatprep.subr.mxu0 0.0
        %880 = vmatpush1.msra.mxu0 0.0
        %881 = vmatprep.mubr.f32.mxu0 0.0
        %882 = vmatmul.mubr.f32.gmra.mrb[0].mxu0 %v458
        %v883 = vpop.f32.mrb[0].mxu0
        %v884 = vadd.f32 %v435, %v883
        %v885 = vpop.f32.mrb[0].mxu0
        %886 = vmatprep.mubr.f32.mxu0 0.0
        %887 = vmatmul.mubr.f32.gmra.mrb[0].mxu0 %v461
        %v888 = vpop.f32.mrb[0].mxu0
        %v889 = vadd.f32 %v435, %v888
        %v890 = vpop.f32.mrb[0].mxu0
        %891 = vmatprep.mubr.f32.mxu0 0.0
        %892 = vmatmul.mubr.f32.gmra.mrb[0].mxu0 %v464
        %v893 = vpop.f32.mrb[0].mxu0
        %v894 = vadd.f32 %v435, %v893
        %v895 = vpop.f32.mrb[0].mxu0
        %896 = vmatprep.mubr.f32.mxu0 0.0
        %897 = vmatmul.mubr.f32.gmra.mrb[0].mxu0 %v467
        %v898 = vpop.f32.mrb[0].mxu0
        %v899 = vadd.f32 %v435, %v898
        %v900 = vpop.f32.mrb[0].mxu0
        %901 = vmatprep.mubr.f32.mxu0 0.0
        %902 = vmatmul.mubr.f32.gmra.mrb[0].mxu0 %v470
        %v903 = vpop.f32.mrb[0].mxu0
        %v904 = vadd.f32 %v435, %v903
        %v905 = vpop.f32.mrb[0].mxu0
        %906 = vmatprep.mubr.f32.mxu0 0.0
        %907 = vmatmul.mubr.f32.gmra.mrb[0].mxu0 %v473
        %v908 = vpop.f32.mrb[0].mxu0
        %v909 = vadd.f32 %v435, %v908
        %v910 = vpop.f32.mrb[0].mxu0
        %911 = vmatprep.mubr.f32.mxu0 0.0
        %912 = vmatmul.mubr.f32.gmra.mrb[0].mxu0 %v476
        %v913 = vpop.f32.mrb[0].mxu0
        %v914 = vadd.f32 %v435, %v913
        %v915 = vpop.f32.mrb[0].mxu0
        %916 = vmatprep.mubr.f32.mxu0 0.0
        %917 = vmatmul.mubr.f32.gmra.mrb[0].mxu0 %v479
        %v918 = vpop.f32.mrb[0].mxu0
        %v919 = vadd.f32 %v435, %v918
        %v920 = vpop.f32.mrb[0].mxu0
        %921 = vmatprep.mubr.f32.mxu0 0.0
        %922 = vmatmul.mubr.f32.gmra.mrb[0].mxu0 %v482
        %v923 = vpop.f32.mrb[0].mxu0
        %v924 = vadd.f32 %v435, %v923
        %v925 = vpop.f32.mrb[0].mxu0
        %926 = vmatprep.mubr.f32.mxu0 0.0
        %927 = vmatmul.mubr.f32.gmra.mrb[0].mxu0 %v485
        %v928 = vpop.f32.mrb[0].mxu0
        %v929 = vadd.f32 %v435, %v928
        %v930 = vpop.f32.mrb[0].mxu0
        %931 = vmatprep.mubr.f32.mxu0 0.0
        %932 = vmatmul.mubr.f32.gmra.mrb[0].mxu0 %v488
        %v933 = vpop.f32.mrb[0].mxu0
        %v934 = vadd.f32 %v435, %v933
        %v935 = vpop.f32.mrb[0].mxu0
        %936 = vmatprep.mubr.f32.mxu0 0.0
        %937 = vmatmul.mubr.f32.gmra.mrb[0].mxu0 %v491
        %v938 = vpop.f32.mrb[0].mxu0
        %v939 = vadd.f32 %v435, %v938
        %v940 = vpop.f32.mrb[0].mxu0
        %941 = vmatprep.mubr.f32.mxu0 0.0
        %942 = vmatmul.mubr.f32.gmra.mrb[0].mxu0 %v494
        %v943 = vpop.f32.mrb[0].mxu0
        %v944 = vadd.f32 %v435, %v943
        %v945 = vpop.f32.mrb[0].mxu0
        %946 = vmatprep.mubr.f32.mxu0 0.0
        %947 = vmatmul.mubr.f32.gmra.mrb[0].mxu0 %v497
        %v948 = vpop.f32.mrb[0].mxu0
        %v949 = vadd.f32 %v435, %v948
        %v950 = vpop.f32.mrb[0].mxu0
        %951 = vmatprep.mubr.f32.mxu0 0.0
        %952 = vmatmul.mubr.f32.gmra.mrb[0].mxu0 %v500
        %v953 = vpop.f32.mrb[0].mxu0
        %v954 = vadd.f32 %v435, %v953
        %v955 = vpop.f32.mrb[0].mxu0
        %956 = vmatprep.mubr.f32.mxu0 0.0
        %957 = vmatmul.mubr.f32.gmra.mrb[0].mxu0 %v503
        %v958 = vpop.f32.mrb[0].mxu0
        %v959 = vadd.f32 %v435, %v958
        %v960 = vpop.f32.mrb[0].mxu0
        %961 = vmatprep.mubr.f32.mxu0 0.0
        %962 = vmatmul.mubr.f32.gmra.mrb[0].mxu0 %v506
        %v963 = vpop.f32.mrb[0].mxu0
        %v964 = vadd.f32 %v435, %v963
        %v965 = vpop.f32.mrb[0].mxu0
        %966 = vmatprep.mubr.f32.mxu0 0.0
        %967 = vmatmul.mubr.f32.gmra.mrb[0].mxu0 %v509
        %v968 = vpop.f32.mrb[0].mxu0
        %v969 = vadd.f32 %v435, %v968
        %v970 = vpop.f32.mrb[0].mxu0
        %971 = vmatprep.mubr.f32.mxu0 0.0
        %972 = vmatmul.mubr.f32.gmra.mrb[0].mxu0 %v512
        %v973 = vpop.f32.mrb[0].mxu0
        %v974 = vadd.f32 %v435, %v973
        %v975 = vpop.f32.mrb[0].mxu0
        %976 = vmatprep.mubr.f32.mxu0 0.0
        %977 = vmatmul.mubr.f32.gmra.mrb[0].mxu0 %v515
        %v978 = vpop.f32.mrb[0].mxu0
        %v979 = vadd.f32 %v435, %v978
        %v980 = vpop.f32.mrb[0].mxu0
        %981 = vmatprep.mubr.f32.mxu0 0.0
        %982 = vmatmul.mubr.f32.gmra.mrb[0].mxu0 %v518
        %v983 = vpop.f32.mrb[0].mxu0
        %v984 = vadd.f32 %v435, %v983
        %v985 = vpop.f32.mrb[0].mxu0
        %986 = vmatprep.mubr.f32.mxu0 0.0
        %987 = vmatmul.mubr.f32.gmra.mrb[0].mxu0 %v521
        %v988 = vpop.f32.mrb[0].mxu0
        %v989 = vadd.f32 %v435, %v988
        %v990 = vpop.f32.mrb[0].mxu0
        %991 = vmatprep.mubr.f32.mxu0 0.0
        %992 = vmatmul.mubr.f32.gmra.mrb[0].mxu0 %v524
        %v993 = vpop.f32.mrb[0].mxu0
        %v994 = vadd.f32 %v435, %v993
        %v995 = vpop.f32.mrb[0].mxu0
        %996 = vmatprep.mubr.f32.mxu0 0.0
        %997 = vmatmul.mubr.f32.gmra.mrb[0].mxu0 %v527
        %v998 = vpop.f32.mrb[0].mxu0
        %v999 = vadd.f32 %v435, %v998
        %v1000 = vpop.f32.mrb[0].mxu0
        %1001 = vmatprep.mubr.f32.mxu0 0.0
        %1002 = vmatmul.mubr.f32.gmra.mrb[0].mxu0 %v530
        %v1003 = vpop.f32.mrb[0].mxu0
        %v1004 = vadd.f32 %v435, %v1003
        %v1005 = vpop.f32.mrb[0].mxu0
        %1006 = vmatprep.mubr.f32.mxu0 0.0
        %1007 = vmatmul.mubr.f32.gmra.mrb[0].mxu0 %v533
        %v1008 = vpop.f32.mrb[0].mxu0
        %v1009 = vadd.f32 %v435, %v1008
        %v1010 = vpop.f32.mrb[0].mxu0
        %1011 = vmatprep.mubr.f32.mxu0 0.0
        %1012 = vmatmul.mubr.f32.gmra.mrb[0].mxu0 %v536
        %v1013 = vpop.f32.mrb[0].mxu0
        %v1014 = vadd.f32 %v435, %v1013
        %v1015 = vpop.f32.mrb[0].mxu0
        %1016 = vmatprep.mubr.f32.mxu0 0.0
        %1017 = vmatmul.mubr.f32.gmra.mrb[0].mxu0 %v539
        %v1018 = vpop.f32.mrb[0].mxu0
        %v1019 = vadd.f32 %v435, %v1018
        %v1020 = vpop.f32.mrb[0].mxu0
        %1021 = vmatprep.mubr.f32.mxu0 0.0
        %1022 = vmatmul.mubr.f32.gmra.mrb[0].mxu0 %v542
        %v1023 = vpop.f32.mrb[0].mxu0
        %v1024 = vadd.f32 %v435, %v1023
        %v1025 = vpop.f32.mrb[0].mxu0
        %1026 = vmatprep.mubr.f32.mxu0 0.0
        %1027 = vmatmul.mubr.f32.gmra.mrb[0].mxu0 %v545
        %v1028 = vpop.f32.mrb[0].mxu0
        %v1029 = vadd.f32 %v435, %v1028
        %v1030 = vpop.f32.mrb[0].mxu0
        %1031 = vmatprep.mubr.f32.mxu0 0.0
        %1032 = vmatmul.mubr.f32.gmra.mrb[0].mxu0 %v548
        %v1033 = vpop.f32.mrb[0].mxu0
        %v1034 = vadd.f32 %v435, %v1033
        %v1035 = vpop.f32.mrb[0].mxu0
        %1036 = vmatprep.mubr.f32.mxu0 0.0
        %1037 = vmatmul.mubr.f32.gmra.mrb[0].mxu0 %v551
        %v1038 = vpop.f32.mrb[0].mxu0
        %v1039 = vadd.f32 %v435, %v1038
        %v1040 = vpop.f32.mrb[0].mxu0
        %1041 = vdwg.mxu0
        %v1042 = vtanh.pop %v627
        %v1043 = vtanh.pop %v629
        %v1044 = vtanh.pop %v884
        %v1045 = vtanh.pop %v633
        %v1046 = vtanh.pop %v635
        %v1047 = vtanh.pop %v889
        %v1048 = vtanh.pop %v639
        %v1049 = vtanh.pop %v641
        %v1050 = vtanh.pop %v894
        %v1051 = vtanh.pop %v645
        %v1052 = vtanh.pop %v647
        %v1053 = vtanh.pop %v899
        %v1054 = vtanh.pop %v651
        %v1055 = vtanh.pop %v653
        %v1056 = vtanh.pop %v904
        %v1057 = vtanh.pop %v657
        %v1058 = vtanh.pop %v659
        %v1059 = vtanh.pop %v909
        %v1060 = vtanh.pop %v663
        %v1061 = vtanh.pop %v665
        %v1062 = vtanh.pop %v914
        %v1063 = vtanh.pop %v669
        %v1064 = vtanh.pop %v671
        %v1065 = vtanh.pop %v919
        %v1066 = vtanh.pop %v675
        %v1067 = vtanh.pop %v677
        %v1068 = vtanh.pop %v924
        %v1069 = vtanh.pop %v681
        %v1070 = vtanh.pop %v683
        %v1071 = vtanh.pop %v929
        %v1072 = vtanh.pop %v687
        %v1073 = vtanh.pop %v689
        %v1074 = vtanh.pop %v934
        %v1075 = vtanh.pop %v693
        %v1076 = vtanh.pop %v695
        %v1077 = vtanh.pop %v939
        %v1078 = vtanh.pop %v699
        %v1079 = vtanh.pop %v701
        %v1080 = vtanh.pop %v944
        %v1081 = vtanh.pop %v705
        %v1082 = vtanh.pop %v707
        %v1083 = vtanh.pop %v949
        %v1084 = vtanh.pop %v711
        %v1085 = vtanh.pop %v713
        %v1086 = vtanh.pop %v954
        %v1087 = vtanh.pop %v717
        %v1088 = vtanh.pop %v719
        %v1089 = vtanh.pop %v959
        %v1090 = vtanh.pop %v723
        %v1091 = vtanh.pop %v725
        %v1092 = vtanh.pop %v964
        %v1093 = vtanh.pop %v729
        %v1094 = vtanh.pop %v731
        %v1095 = vtanh.pop %v969
        %v1096 = vtanh.pop %v735
        %v1097 = vtanh.pop %v737
        %v1098 = vtanh.pop %v974
        %v1099 = vtanh.pop %v741
        %v1100 = vtanh.pop %v743
        %v1101 = vtanh.pop %v979
        %v1102 = vtanh.pop %v747
        %v1103 = vtanh.pop %v749
        %v1104 = vtanh.pop %v984
        %v1105 = vtanh.pop %v753
        %v1106 = vtanh.pop %v755
        %v1107 = vtanh.pop %v989
        %v1108 = vtanh.pop %v759
        %v1109 = vtanh.pop %v761
        %v1110 = vtanh.pop %v994
        %v1111 = vtanh.pop %v765
        %v1112 = vtanh.pop %v767
        %v1113 = vtanh.pop %v999
        %v1114 = vtanh.pop %v771
        %v1115 = vtanh.pop %v773
        %v1116 = vtanh.pop %v1004
        %v1117 = vtanh.pop %v777
        %v1118 = vtanh.pop %v779
        %v1119 = vtanh.pop %v1009
        %v1120 = vtanh.pop %v783
        %v1121 = vtanh.pop %v785
        %v1122 = vtanh.pop %v1014
        %v1123 = vtanh.pop %v789
        %v1124 = vtanh.pop %v791
        %v1125 = vtanh.pop %v1019
        %v1126 = vtanh.pop %v795
        %v1127 = vtanh.pop %v797
        %v1128 = vtanh.pop %v1024
        %v1129 = vtanh.pop %v801
        %v1130 = vtanh.pop %v803
        %v1131 = vtanh.pop %v1029
        %v1132 = vtanh.pop %v807
        %v1133 = vtanh.pop %v809
        %v1134 = vtanh.pop %v1034
        %v1135 = vtanh.pop %v813
        %v1136 = vtanh.pop %v815
        %v1137 = vtanh.pop %v1039
        %v1138 = vsub.f32 %v1042, %v1043
        %v1139 = vsub.f32 %v1045, %v1046
        %v1140 = vsub.f32 %v1048, %v1049
        %v1141 = vsub.f32 %v1051, %v1052
        %v1142 = vsub.f32 %v1054, %v1055
        %v1143 = vsub.f32 %v1057, %v1058
        %v1144 = vsub.f32 %v1060, %v1061
        %v1145 = vsub.f32 %v1063, %v1064
        %v1146 = vsub.f32 %v1066, %v1067
        %v1147 = vsub.f32 %v1069, %v1070
        %v1148 = vsub.f32 %v1072, %v1073
        %v1149 = vsub.f32 %v1075, %v1076
        %v1150 = vsub.f32 %v1078, %v1079
        %v1151 = vsub.f32 %v1081, %v1082
        %v1152 = vsub.f32 %v1084, %v1085
        %v1153 = vsub.f32 %v1087, %v1088
        %v1154 = vsub.f32 %v1090, %v1091
        %v1155 = vsub.f32 %v1093, %v1094
        %v1156 = vsub.f32 %v1096, %v1097
        %v1157 = vsub.f32 %v1099, %v1100
        %v1158 = vsub.f32 %v1102, %v1103
        %v1159 = vsub.f32 %v1105, %v1106
        %v1160 = vsub.f32 %v1108, %v1109
        %v1161 = vsub.f32 %v1111, %v1112
        %v1162 = vsub.f32 %v1114, %v1115
        %v1163 = vsub.f32 %v1117, %v1118
        %v1164 = vsub.f32 %v1120, %v1121
        %v1165 = vsub.f32 %v1123, %v1124
        %v1166 = vsub.f32 %v1126, %v1127
        %v1167 = vsub.f32 %v1129, %v1130
        %v1168 = vsub.f32 %v1132, %v1133
        %v1169 = vsub.f32 %v1135, %v1136
        %v1170 = vmul.f32 %v1044, %v1138
        %v1171 = vmul.f32 %v1047, %v1139
        %v1172 = vmul.f32 %v1050, %v1140
        %v1173 = vmul.f32 %v1053, %v1141
        %v1174 = vmul.f32 %v1056, %v1142
        %v1175 = vmul.f32 %v1059, %v1143
        %v1176 = vmul.f32 %v1062, %v1144
        %v1177 = vmul.f32 %v1065, %v1145
        %v1178 = vmul.f32 %v1068, %v1146
        %v1179 = vmul.f32 %v1071, %v1147
        %v1180 = vmul.f32 %v1074, %v1148
        %v1181 = vmul.f32 %v1077, %v1149
        %v1182 = vmul.f32 %v1080, %v1150
        %v1183 = vmul.f32 %v1083, %v1151
        %v1184 = vmul.f32 %v1086, %v1152
        %v1185 = vmul.f32 %v1089, %v1153
        %v1186 = vmul.f32 %v1092, %v1154
        %v1187 = vmul.f32 %v1095, %v1155
        %v1188 = vmul.f32 %v1098, %v1156
        %v1189 = vmul.f32 %v1101, %v1157
        %v1190 = vmul.f32 %v1104, %v1158
        %v1191 = vmul.f32 %v1107, %v1159
        %v1192 = vmul.f32 %v1110, %v1160
        %v1193 = vmul.f32 %v1113, %v1161
        %v1194 = vmul.f32 %v1116, %v1162
        %v1195 = vmul.f32 %v1119, %v1163
        %v1196 = vmul.f32 %v1122, %v1164
        %v1197 = vmul.f32 %v1125, %v1165
        %v1198 = vmul.f32 %v1128, %v1166
        %v1199 = vmul.f32 %v1131, %v1167
        %v1200 = vmul.f32 %v1134, %v1168
        %v1201 = vmul.f32 %v1137, %v1169
        %v1202 = vadd.f32 %v1043, %v1170
        %v1203 = vadd.f32 %v1046, %v1171
        %v1204 = vadd.f32 %v1049, %v1172
        %v1205 = vadd.f32 %v1052, %v1173
        %v1206 = vadd.f32 %v1055, %v1174
        %v1207 = vadd.f32 %v1058, %v1175
        %v1208 = vadd.f32 %v1061, %v1176
        %v1209 = vadd.f32 %v1064, %v1177
        %v1210 = vadd.f32 %v1067, %v1178
        %v1211 = vadd.f32 %v1070, %v1179
        %v1212 = vadd.f32 %v1073, %v1180
        %v1213 = vadd.f32 %v1076, %v1181
        %v1214 = vadd.f32 %v1079, %v1182
        %v1215 = vadd.f32 %v1082, %v1183
        %v1216 = vadd.f32 %v1085, %v1184
        %v1217 = vadd.f32 %v1088, %v1185
        %v1218 = vadd.f32 %v1091, %v1186
        %v1219 = vadd.f32 %v1094, %v1187
        %v1220 = vadd.f32 %v1097, %v1188
        %v1221 = vadd.f32 %v1100, %v1189
        %v1222 = vadd.f32 %v1103, %v1190
        %v1223 = vadd.f32 %v1106, %v1191
        %v1224 = vadd.f32 %v1109, %v1192
        %v1225 = vadd.f32 %v1112, %v1193
        %v1226 = vadd.f32 %v1115, %v1194
        %v1227 = vadd.f32 %v1118, %v1195
        %v1228 = vadd.f32 %v1121, %v1196
        %v1229 = vadd.f32 %v1124, %v1197
        %v1230 = vadd.f32 %v1127, %v1198
        %v1231 = vadd.f32 %v1130, %v1199
        %v1232 = vadd.f32 %v1133, %v1200
        %v1233 = vadd.f32 %v1136, %v1201
        %v1234 = vld [vmem:[%s3] sm:$0xff]
        %v1235 = vld [vmem:[%s3 + $0x8] sm:$0xff]
        %v1236 = vld [vmem:[%s3 + $0x10] sm:$0xff]
        %v1237 = vld [vmem:[%s3 + $0x18] sm:$0xff]
        %v1238 = vld [vmem:[%s3 + $0x20] sm:$0xff]
        %v1239 = vld [vmem:[%s3 + $0x28] sm:$0xff]
        %v1240 = vld [vmem:[%s3 + $0x30] sm:$0xff]
        %v1241 = vld [vmem:[%s3 + $0x38] sm:$0xff]
        %v1242 = vld [vmem:[%s3 + $0x40] sm:$0xff]
        %v1243 = vld [vmem:[%s3 + $0x48] sm:$0xff]
        %v1244 = vld [vmem:[%s3 + $0x50] sm:$0xff]
        %v1245 = vld [vmem:[%s3 + $0x58] sm:$0xff]
        %v1246 = vld [vmem:[%s3 + $0x60] sm:$0xff]
        %v1247 = vld [vmem:[%s3 + $0x68] sm:$0xff]
        %v1248 = vld [vmem:[%s3 + $0x70] sm:$0xff]
        %v1249 = vld [vmem:[%s3 + $0x78] sm:$0xff]
        %v1250 = vld [vmem:[%s4] sm:$0x1]
        %v1252 = vlaneseq
        %v1253 = vshrl.u32 %v1252, 7
        %v1254 = vsub.s32 0, %v1253
        %v1255 = vrot.slane %v1250, %v1254
        %1257 = vmatprep.subr.mxu0 0.0
        %1258 = vmatpush1.msra.mxu0 %v1234
        %1259 = vmatprep.subr.mxu0 0.0
        %1260 = vmatpush1.msra.mxu0 %v1235
        %1261 = vmatprep.subr.mxu0 0.0
        %1262 = vmatpush1.msra.mxu0 %v1236
        %1263 = vmatprep.subr.mxu0 0.0
        %1264 = vmatpush1.msra.mxu0 %v1237
        %1265 = vmatprep.subr.mxu0 0.0
        %1266 = vmatpush1.msra.mxu0 %v1238
        %1267 = vmatprep.subr.mxu0 0.0
        %1268 = vmatpush1.msra.mxu0 %v1239
        %1269 = vmatprep.subr.mxu0 0.0
        %1270 = vmatpush1.msra.mxu0 %v1240
        %1271 = vmatprep.subr.mxu0 0.0
        %1272 = vmatpush1.msra.mxu0 %v1241
        %1273 = vmatprep.subr.mxu0 0.0
        %1274 = vmatpush1.msra.mxu0 %v1242
        %1275 = vmatprep.subr.mxu0 0.0
        %1276 = vmatpush1.msra.mxu0 %v1243
        %1277 = vmatprep.subr.mxu0 0.0
        %1278 = vmatpush1.msra.mxu0 %v1244
        %1279 = vmatprep.subr.mxu0 0.0
        %1280 = vmatpush1.msra.mxu0 %v1245
        %1281 = vmatprep.subr.mxu0 0.0
        %1282 = vmatpush1.msra.mxu0 %v1246
        %1283 = vmatprep.subr.mxu0 0.0
        %1284 = vmatpush1.msra.mxu0 %v1247
        %1285 = vmatprep.subr.mxu0 0.0
        %1286 = vmatpush1.msra.mxu0 %v1248
        %1287 = vmatprep.subr.mxu0 0.0
        %1288 = vmatpush1.msra.mxu0 %v1249
        %1289 = vmatprep.subr.mxu0 0.0
        %1290 = vmatpush1.msra.mxu0 0.0
        %1291 = vmatprep.subr.mxu0 0.0
        %1292 = vmatpush1.msra.mxu0 0.0
        %1293 = vmatprep.subr.mxu0 0.0
        %1294 = vmatpush1.msra.mxu0 0.0
        %1295 = vmatprep.subr.mxu0 0.0
        %1296 = vmatpush1.msra.mxu0 0.0
        %1297 = vmatprep.subr.mxu0 0.0
        %1298 = vmatpush1.msra.mxu0 0.0
        %1299 = vmatprep.subr.mxu0 0.0
        %1300 = vmatpush1.msra.mxu0 0.0
        %1301 = vmatprep.subr.mxu0 0.0
        %1302 = vmatpush1.msra.mxu0 0.0
        %1303 = vmatprep.subr.mxu0 0.0
        %1304 = vmatpush1.msra.mxu0 0.0
        %1305 = vmatprep.subr.mxu0 0.0
        %1306 = vmatpush1.msra.mxu0 0.0
        %1307 = vmatprep.subr.mxu0 0.0
        %1308 = vmatpush1.msra.mxu0 0.0
        %1309 = vmatprep.subr.mxu0 0.0
        %1310 = vmatpush1.msra.mxu0 0.0
        %1311 = vmatprep.subr.mxu0 0.0
        %1312 = vmatpush1.msra.mxu0 0.0
        %1313 = vmatprep.subr.mxu0 0.0
        %1314 = vmatpush1.msra.mxu0 0.0
        %1315 = vmatprep.subr.mxu0 0.0
        %1316 = vmatpush1.msra.mxu0 0.0
        %1317 = vmatprep.subr.mxu0 0.0
        %1318 = vmatpush1.msra.mxu0 0.0
        %1319 = vmatprep.subr.mxu0 0.0
        %1320 = vmatpush1.msra.mxu0 0.0
        %1321 = vmatprep.mubr.f32.mxu0 0.0
        %1322 = vmatmul.mubr.f32.gmra.mrb[0].mxu0 %v1202
        %v1323 = vpop.f32.mrb[0].mxu0
        %v1324 = vadd.f32 %v1255, %v1323
        %v1325 = vpop.f32.mrb[0].mxu0
        %1326 = vmatprep.mubr.f32.mxu0 0.0
        %1327 = vmatmul.mubr.f32.gmra.mrb[0].mxu0 %v1203
        %v1328 = vpop.f32.mrb[0].mxu0
        %v1329 = vadd.f32 %v1255, %v1328
        %v1330 = vpop.f32.mrb[0].mxu0
        %1331 = vmatprep.mubr.f32.mxu0 0.0
        %1332 = vmatmul.mubr.f32.gmra.mrb[0].mxu0 %v1204
        %v1333 = vpop.f32.mrb[0].mxu0
        %v1334 = vadd.f32 %v1255, %v1333
        %v1335 = vpop.f32.mrb[0].mxu0
        %1336 = vmatprep.mubr.f32.mxu0 0.0
        %1337 = vmatmul.mubr.f32.gmra.mrb[0].mxu0 %v1205
        %v1338 = vpop.f32.mrb[0].mxu0
        %v1339 = vadd.f32 %v1255, %v1338
        %v1340 = vpop.f32.mrb[0].mxu0
        %1341 = vmatprep.mubr.f32.mxu0 0.0
        %1342 = vmatmul.mubr.f32.gmra.mrb[0].mxu0 %v1206
        %v1343 = vpop.f32.mrb[0].mxu0
        %v1344 = vadd.f32 %v1255, %v1343
        %v1345 = vpop.f32.mrb[0].mxu0
        %1346 = vmatprep.mubr.f32.mxu0 0.0
        %1347 = vmatmul.mubr.f32.gmra.mrb[0].mxu0 %v1207
        %v1348 = vpop.f32.mrb[0].mxu0
        %v1349 = vadd.f32 %v1255, %v1348
        %v1350 = vpop.f32.mrb[0].mxu0
        %1351 = vmatprep.mubr.f32.mxu0 0.0
        %1352 = vmatmul.mubr.f32.gmra.mrb[0].mxu0 %v1208
        %v1353 = vpop.f32.mrb[0].mxu0
        %v1354 = vadd.f32 %v1255, %v1353
        %v1355 = vpop.f32.mrb[0].mxu0
        %1356 = vmatprep.mubr.f32.mxu0 0.0
        %1357 = vmatmul.mubr.f32.gmra.mrb[0].mxu0 %v1209
        %v1358 = vpop.f32.mrb[0].mxu0
        %v1359 = vadd.f32 %v1255, %v1358
        %v1360 = vpop.f32.mrb[0].mxu0
        %1361 = vmatprep.mubr.f32.mxu0 0.0
        %1362 = vmatmul.mubr.f32.gmra.mrb[0].mxu0 %v1210
        %v1363 = vpop.f32.mrb[0].mxu0
        %v1364 = vadd.f32 %v1255, %v1363
        %v1365 = vpop.f32.mrb[0].mxu0
        %1366 = vmatprep.mubr.f32.mxu0 0.0
        %1367 = vmatmul.mubr.f32.gmra.mrb[0].mxu0 %v1211
        %v1368 = vpop.f32.mrb[0].mxu0
        %v1369 = vadd.f32 %v1255, %v1368
        %v1370 = vpop.f32.mrb[0].mxu0
        %1371 = vmatprep.mubr.f32.mxu0 0.0
        %1372 = vmatmul.mubr.f32.gmra.mrb[0].mxu0 %v1212
        %v1373 = vpop.f32.mrb[0].mxu0
        %v1374 = vadd.f32 %v1255, %v1373
        %v1375 = vpop.f32.mrb[0].mxu0
        %1376 = vmatprep.mubr.f32.mxu0 0.0
        %1377 = vmatmul.mubr.f32.gmra.mrb[0].mxu0 %v1213
        %v1378 = vpop.f32.mrb[0].mxu0
        %v1379 = vadd.f32 %v1255, %v1378
        %v1380 = vpop.f32.mrb[0].mxu0
        %1381 = vmatprep.mubr.f32.mxu0 0.0
        %1382 = vmatmul.mubr.f32.gmra.mrb[0].mxu0 %v1214
        %v1383 = vpop.f32.mrb[0].mxu0
        %v1384 = vadd.f32 %v1255, %v1383
        %v1385 = vpop.f32.mrb[0].mxu0
        %1386 = vmatprep.mubr.f32.mxu0 0.0
        %1387 = vmatmul.mubr.f32.gmra.mrb[0].mxu0 %v1215
        %v1388 = vpop.f32.mrb[0].mxu0
        %v1389 = vadd.f32 %v1255, %v1388
        %v1390 = vpop.f32.mrb[0].mxu0
        %1391 = vmatprep.mubr.f32.mxu0 0.0
        %1392 = vmatmul.mubr.f32.gmra.mrb[0].mxu0 %v1216
        %v1393 = vpop.f32.mrb[0].mxu0
        %v1394 = vadd.f32 %v1255, %v1393
        %v1395 = vpop.f32.mrb[0].mxu0
        %1396 = vmatprep.mubr.f32.mxu0 0.0
        %1397 = vmatmul.mubr.f32.gmra.mrb[0].mxu0 %v1217
        %v1398 = vpop.f32.mrb[0].mxu0
        %v1399 = vadd.f32 %v1255, %v1398
        %v1400 = vpop.f32.mrb[0].mxu0
        %1401 = vmatprep.mubr.f32.mxu0 0.0
        %1402 = vmatmul.mubr.f32.gmra.mrb[0].mxu0 %v1218
        %v1403 = vpop.f32.mrb[0].mxu0
        %v1404 = vadd.f32 %v1255, %v1403
        %v1405 = vpop.f32.mrb[0].mxu0
        %1406 = vmatprep.mubr.f32.mxu0 0.0
        %1407 = vmatmul.mubr.f32.gmra.mrb[0].mxu0 %v1219
        %v1408 = vpop.f32.mrb[0].mxu0
        %v1409 = vadd.f32 %v1255, %v1408
        %v1410 = vpop.f32.mrb[0].mxu0
        %1411 = vmatprep.mubr.f32.mxu0 0.0
        %1412 = vmatmul.mubr.f32.gmra.mrb[0].mxu0 %v1220
        %v1413 = vpop.f32.mrb[0].mxu0
        %v1414 = vadd.f32 %v1255, %v1413
        %v1415 = vpop.f32.mrb[0].mxu0
        %1416 = vmatprep.mubr.f32.mxu0 0.0
        %1417 = vmatmul.mubr.f32.gmra.mrb[0].mxu0 %v1221
        %v1418 = vpop.f32.mrb[0].mxu0
        %v1419 = vadd.f32 %v1255, %v1418
        %v1420 = vpop.f32.mrb[0].mxu0
        %1421 = vmatprep.mubr.f32.mxu0 0.0
        %1422 = vmatmul.mubr.f32.gmra.mrb[0].mxu0 %v1222
        %v1423 = vpop.f32.mrb[0].mxu0
        %v1424 = vadd.f32 %v1255, %v1423
        %v1425 = vpop.f32.mrb[0].mxu0
        %1426 = vmatprep.mubr.f32.mxu0 0.0
        %1427 = vmatmul.mubr.f32.gmra.mrb[0].mxu0 %v1223
        %v1428 = vpop.f32.mrb[0].mxu0
        %v1429 = vadd.f32 %v1255, %v1428
        %v1430 = vpop.f32.mrb[0].mxu0
        %1431 = vmatprep.mubr.f32.mxu0 0.0
        %1432 = vmatmul.mubr.f32.gmra.mrb[0].mxu0 %v1224
        %v1433 = vpop.f32.mrb[0].mxu0
        %v1434 = vadd.f32 %v1255, %v1433
        %v1435 = vpop.f32.mrb[0].mxu0
        %1436 = vmatprep.mubr.f32.mxu0 0.0
        %1437 = vmatmul.mubr.f32.gmra.mrb[0].mxu0 %v1225
        %v1438 = vpop.f32.mrb[0].mxu0
        %v1439 = vadd.f32 %v1255, %v1438
        %v1440 = vpop.f32.mrb[0].mxu0
        %1441 = vmatprep.mubr.f32.mxu0 0.0
        %1442 = vmatmul.mubr.f32.gmra.mrb[0].mxu0 %v1226
        %v1443 = vpop.f32.mrb[0].mxu0
        %v1444 = vadd.f32 %v1255, %v1443
        %v1445 = vpop.f32.mrb[0].mxu0
        %1446 = vmatprep.mubr.f32.mxu0 0.0
        %1447 = vmatmul.mubr.f32.gmra.mrb[0].mxu0 %v1227
        %v1448 = vpop.f32.mrb[0].mxu0
        %v1449 = vadd.f32 %v1255, %v1448
        %v1450 = vpop.f32.mrb[0].mxu0
        %1451 = vmatprep.mubr.f32.mxu0 0.0
        %1452 = vmatmul.mubr.f32.gmra.mrb[0].mxu0 %v1228
        %v1453 = vpop.f32.mrb[0].mxu0
        %v1454 = vadd.f32 %v1255, %v1453
        %v1455 = vpop.f32.mrb[0].mxu0
        %1456 = vmatprep.mubr.f32.mxu0 0.0
        %1457 = vmatmul.mubr.f32.gmra.mrb[0].mxu0 %v1229
        %v1458 = vpop.f32.mrb[0].mxu0
        %v1459 = vadd.f32 %v1255, %v1458
        %v1460 = vpop.f32.mrb[0].mxu0
        %1461 = vmatprep.mubr.f32.mxu0 0.0
        %1462 = vmatmul.mubr.f32.gmra.mrb[0].mxu0 %v1230
        %v1463 = vpop.f32.mrb[0].mxu0
        %v1464 = vadd.f32 %v1255, %v1463
        %v1465 = vpop.f32.mrb[0].mxu0
        %1466 = vmatprep.mubr.f32.mxu0 0.0
        %1467 = vmatmul.mubr.f32.gmra.mrb[0].mxu0 %v1231
        %v1468 = vpop.f32.mrb[0].mxu0
        %v1469 = vadd.f32 %v1255, %v1468
        %v1470 = vpop.f32.mrb[0].mxu0
        %1471 = vmatprep.mubr.f32.mxu0 0.0
        %1472 = vmatmul.mubr.f32.gmra.mrb[0].mxu0 %v1232
        %v1473 = vpop.f32.mrb[0].mxu0
        %v1474 = vadd.f32 %v1255, %v1473
        %v1475 = vpop.f32.mrb[0].mxu0
        %1476 = vmatprep.mubr.f32.mxu0 0.0
        %1477 = vmatmul.mubr.f32.gmra.mrb[0].mxu0 %v1233
        %v1478 = vpop.f32.mrb[0].mxu0
        %v1479 = vadd.f32 %v1255, %v1478
        %v1480 = vpop.f32.mrb[0].mxu0
        %1481 = vdwg.mxu0
        %v1482 = vtanh.pop %v1324
        %v1483 = vtanh.pop %v1329
        %v1484 = vtanh.pop %v1334
        %v1485 = vtanh.pop %v1339
        %v1486 = vtanh.pop %v1344
        %v1487 = vtanh.pop %v1349
        %v1488 = vtanh.pop %v1354
        %v1489 = vtanh.pop %v1359
        %v1490 = vtanh.pop %v1364
        %v1491 = vtanh.pop %v1369
        %v1492 = vtanh.pop %v1374
        %v1493 = vtanh.pop %v1379
        %v1494 = vtanh.pop %v1384
        %v1495 = vtanh.pop %v1389
        %v1496 = vtanh.pop %v1394
        %v1497 = vtanh.pop %v1399
        %v1498 = vtanh.pop %v1404
        %v1499 = vtanh.pop %v1409
        %v1500 = vtanh.pop %v1414
        %v1501 = vtanh.pop %v1419
        %v1502 = vtanh.pop %v1424
        %v1503 = vtanh.pop %v1429
        %v1504 = vtanh.pop %v1434
        %v1505 = vtanh.pop %v1439
        %v1506 = vtanh.pop %v1444
        %v1507 = vtanh.pop %v1449
        %v1508 = vtanh.pop %v1454
        %v1509 = vtanh.pop %v1459
        %v1510 = vtanh.pop %v1464
        %v1511 = vtanh.pop %v1469
        %v1512 = vtanh.pop %v1474
        %v1513 = vtanh.pop %v1479
        %v1514 = vmul.f32 %v1482, %v1138
        %v1515 = vmul.f32 %v1483, %v1139
        %v1516 = vmul.f32 %v1484, %v1140
        %v1517 = vmul.f32 %v1485, %v1141
        %v1518 = vmul.f32 %v1486, %v1142
        %v1519 = vmul.f32 %v1487, %v1143
        %v1520 = vmul.f32 %v1488, %v1144
        %v1521 = vmul.f32 %v1489, %v1145
        %v1522 = vmul.f32 %v1490, %v1146
        %v1523 = vmul.f32 %v1491, %v1147
        %v1524 = vmul.f32 %v1492, %v1148
        %v1525 = vmul.f32 %v1493, %v1149
        %v1526 = vmul.f32 %v1494, %v1150
        %v1527 = vmul.f32 %v1495, %v1151
        %v1528 = vmul.f32 %v1496, %v1152
        %v1529 = vmul.f32 %v1497, %v1153
        %v1530 = vmul.f32 %v1498, %v1154
        %v1531 = vmul.f32 %v1499, %v1155
        %v1532 = vmul.f32 %v1500, %v1156
        %v1533 = vmul.f32 %v1501, %v1157
        %v1534 = vmul.f32 %v1502, %v1158
        %v1535 = vmul.f32 %v1503, %v1159
        %v1536 = vmul.f32 %v1504, %v1160
        %v1537 = vmul.f32 %v1505, %v1161
        %v1538 = vmul.f32 %v1506, %v1162
        %v1539 = vmul.f32 %v1507, %v1163
        %v1540 = vmul.f32 %v1508, %v1164
        %v1541 = vmul.f32 %v1509, %v1165
        %v1542 = vmul.f32 %v1510, %v1166
        %v1543 = vmul.f32 %v1511, %v1167
        %v1544 = vmul.f32 %v1512, %v1168
        %v1545 = vmul.f32 %v1513, %v1169
        %v1546 = vadd.f32 %v1043, %v1514
        %v1547 = vadd.f32 %v1046, %v1515
        %v1548 = vadd.f32 %v1049, %v1516
        %v1549 = vadd.f32 %v1052, %v1517
        %v1550 = vadd.f32 %v1055, %v1518
        %v1551 = vadd.f32 %v1058, %v1519
        %v1552 = vadd.f32 %v1061, %v1520
        %v1553 = vadd.f32 %v1064, %v1521
        %v1554 = vadd.f32 %v1067, %v1522
        %v1555 = vadd.f32 %v1070, %v1523
        %v1556 = vadd.f32 %v1073, %v1524
        %v1557 = vadd.f32 %v1076, %v1525
        %v1558 = vadd.f32 %v1079, %v1526
        %v1559 = vadd.f32 %v1082, %v1527
        %v1560 = vadd.f32 %v1085, %v1528
        %v1561 = vadd.f32 %v1088, %v1529
        %v1562 = vadd.f32 %v1091, %v1530
        %v1563 = vadd.f32 %v1094, %v1531
        %v1564 = vadd.f32 %v1097, %v1532
        %v1565 = vadd.f32 %v1100, %v1533
        %v1566 = vadd.f32 %v1103, %v1534
        %v1567 = vadd.f32 %v1106, %v1535
        %v1568 = vadd.f32 %v1109, %v1536
        %v1569 = vadd.f32 %v1112, %v1537
        %v1570 = vadd.f32 %v1115, %v1538
        %v1571 = vadd.f32 %v1118, %v1539
        %v1572 = vadd.f32 %v1121, %v1540
        %v1573 = vadd.f32 %v1124, %v1541
        %v1574 = vadd.f32 %v1127, %v1542
        %v1575 = vadd.f32 %v1130, %v1543
        %v1576 = vadd.f32 %v1133, %v1544
        %v1577 = vadd.f32 %v1136, %v1545
        %v1578 = vld [vmem:[%s5] sm:$0xff]
        %v1579 = vld [vmem:[%s5 + $0x8] sm:$0xff]
        %v1580 = vld [vmem:[%s5 + $0x10] sm:$0xff]
        %v1581 = vld [vmem:[%s5 + $0x18] sm:$0xff]
        %v1582 = vld [vmem:[%s5 + $0x20] sm:$0xff]
        %v1583 = vld [vmem:[%s5 + $0x28] sm:$0xff]
        %v1584 = vld [vmem:[%s5 + $0x30] sm:$0xff]
        %v1585 = vld [vmem:[%s5 + $0x38] sm:$0xff]
        %v1586 = vld [vmem:[%s5 + $0x40] sm:$0xff]
        %v1587 = vld [vmem:[%s5 + $0x48] sm:$0xff]
        %v1588 = vld [vmem:[%s5 + $0x50] sm:$0xff]
        %v1589 = vld [vmem:[%s5 + $0x58] sm:$0xff]
        %v1590 = vld [vmem:[%s5 + $0x60] sm:$0xff]
        %v1591 = vld [vmem:[%s5 + $0x68] sm:$0xff]
        %v1592 = vld [vmem:[%s5 + $0x70] sm:$0xff]
        %v1593 = vld [vmem:[%s5 + $0x78] sm:$0xff]
        %v1594 = vld [vmem:[%s6] sm:$0x1]
        %v1596 = vlaneseq
        %v1597 = vshrl.u32 %v1596, 7
        %v1598 = vsub.s32 0, %v1597
        %v1599 = vrot.slane %v1594, %v1598
        %1601 = vmatprep.subr.mxu0 0.0
        %1602 = vmatpush1.msra.mxu0 %v1578
        %1603 = vmatprep.subr.mxu0 0.0
        %1604 = vmatpush1.msra.mxu0 %v1579
        %1605 = vmatprep.subr.mxu0 0.0
        %1606 = vmatpush1.msra.mxu0 %v1580
        %1607 = vmatprep.subr.mxu0 0.0
        %1608 = vmatpush1.msra.mxu0 %v1581
        %1609 = vmatprep.subr.mxu0 0.0
        %1610 = vmatpush1.msra.mxu0 %v1582
        %1611 = vmatprep.subr.mxu0 0.0
        %1612 = vmatpush1.msra.mxu0 %v1583
        %1613 = vmatprep.subr.mxu0 0.0
        %1614 = vmatpush1.msra.mxu0 %v1584
        %1615 = vmatprep.subr.mxu0 0.0
        %1616 = vmatpush1.msra.mxu0 %v1585
        %1617 = vmatprep.subr.mxu0 0.0
        %1618 = vmatpush1.msra.mxu0 %v1586
        %1619 = vmatprep.subr.mxu0 0.0
        %1620 = vmatpush1.msra.mxu0 %v1587
        %1621 = vmatprep.subr.mxu0 0.0
        %1622 = vmatpush1.msra.mxu0 %v1588
        %1623 = vmatprep.subr.mxu0 0.0
        %1624 = vmatpush1.msra.mxu0 %v1589
        %1625 = vmatprep.subr.mxu0 0.0
        %1626 = vmatpush1.msra.mxu0 %v1590
        %1627 = vmatprep.subr.mxu0 0.0
        %1628 = vmatpush1.msra.mxu0 %v1591
        %1629 = vmatprep.subr.mxu0 0.0
        %1630 = vmatpush1.msra.mxu0 %v1592
        %1631 = vmatprep.subr.mxu0 0.0
        %1632 = vmatpush1.msra.mxu0 %v1593
        %1633 = vmatprep.subr.mxu0 0.0
        %1634 = vmatpush1.msra.mxu0 0.0
        %1635 = vmatprep.subr.mxu0 0.0
        %1636 = vmatpush1.msra.mxu0 0.0
        %1637 = vmatprep.subr.mxu0 0.0
        %1638 = vmatpush1.msra.mxu0 0.0
        %1639 = vmatprep.subr.mxu0 0.0
        %1640 = vmatpush1.msra.mxu0 0.0
        %1641 = vmatprep.subr.mxu0 0.0
        %1642 = vmatpush1.msra.mxu0 0.0
        %1643 = vmatprep.subr.mxu0 0.0
        %1644 = vmatpush1.msra.mxu0 0.0
        %1645 = vmatprep.subr.mxu0 0.0
        %1646 = vmatpush1.msra.mxu0 0.0
        %1647 = vmatprep.subr.mxu0 0.0
        %1648 = vmatpush1.msra.mxu0 0.0
        %1649 = vmatprep.subr.mxu0 0.0
        %1650 = vmatpush1.msra.mxu0 0.0
        %1651 = vmatprep.subr.mxu0 0.0
        %1652 = vmatpush1.msra.mxu0 0.0
        %1653 = vmatprep.subr.mxu0 0.0
        %1654 = vmatpush1.msra.mxu0 0.0
        %1655 = vmatprep.subr.mxu0 0.0
        %1656 = vmatpush1.msra.mxu0 0.0
        %1657 = vmatprep.subr.mxu0 0.0
        %1658 = vmatpush1.msra.mxu0 0.0
        %1659 = vmatprep.subr.mxu0 0.0
        %1660 = vmatpush1.msra.mxu0 0.0
        %1661 = vmatprep.subr.mxu0 0.0
        %1662 = vmatpush1.msra.mxu0 0.0
        %1663 = vmatprep.subr.mxu0 0.0
        %1664 = vmatpush1.msra.mxu0 0.0
        %1665 = vmatprep.mubr.f32.mxu0 0.0
        %1666 = vmatmul.mubr.f32.gmra.mrb[0].mxu0 %v1546
        %v1667 = vpop.f32.mrb[0].mxu0
        %v1668 = vadd.f32 %v1599, %v1667
        %v1669 = vpop.f32.mrb[0].mxu0
        %1670 = vmatprep.mubr.f32.mxu0 0.0
        %1671 = vmatmul.mubr.f32.gmra.mrb[0].mxu0 %v1547
        %v1672 = vpop.f32.mrb[0].mxu0
        %v1673 = vadd.f32 %v1599, %v1672
        %v1674 = vpop.f32.mrb[0].mxu0
        %1675 = vmatprep.mubr.f32.mxu0 0.0
        %1676 = vmatmul.mubr.f32.gmra.mrb[0].mxu0 %v1548
        %v1677 = vpop.f32.mrb[0].mxu0
        %v1678 = vadd.f32 %v1599, %v1677
        %v1679 = vpop.f32.mrb[0].mxu0
        %1680 = vmatprep.mubr.f32.mxu0 0.0
        %1681 = vmatmul.mubr.f32.gmra.mrb[0].mxu0 %v1549
        %v1682 = vpop.f32.mrb[0].mxu0
        %v1683 = vadd.f32 %v1599, %v1682
        %v1684 = vpop.f32.mrb[0].mxu0
        %1685 = vmatprep.mubr.f32.mxu0 0.0
        %1686 = vmatmul.mubr.f32.gmra.mrb[0].mxu0 %v1550
        %v1687 = vpop.f32.mrb[0].mxu0
        %v1688 = vadd.f32 %v1599, %v1687
        %v1689 = vpop.f32.mrb[0].mxu0
        %1690 = vmatprep.mubr.f32.mxu0 0.0
        %1691 = vmatmul.mubr.f32.gmra.mrb[0].mxu0 %v1551
        %v1692 = vpop.f32.mrb[0].mxu0
        %v1693 = vadd.f32 %v1599, %v1692
        %v1694 = vpop.f32.mrb[0].mxu0
        %1695 = vmatprep.mubr.f32.mxu0 0.0
        %1696 = vmatmul.mubr.f32.gmra.mrb[0].mxu0 %v1552
        %v1697 = vpop.f32.mrb[0].mxu0
        %v1698 = vadd.f32 %v1599, %v1697
        %v1699 = vpop.f32.mrb[0].mxu0
        %1700 = vmatprep.mubr.f32.mxu0 0.0
        %1701 = vmatmul.mubr.f32.gmra.mrb[0].mxu0 %v1553
        %v1702 = vpop.f32.mrb[0].mxu0
        %v1703 = vadd.f32 %v1599, %v1702
        %v1704 = vpop.f32.mrb[0].mxu0
        %1705 = vmatprep.mubr.f32.mxu0 0.0
        %1706 = vmatmul.mubr.f32.gmra.mrb[0].mxu0 %v1554
        %v1707 = vpop.f32.mrb[0].mxu0
        %v1708 = vadd.f32 %v1599, %v1707
        %v1709 = vpop.f32.mrb[0].mxu0
        %1710 = vmatprep.mubr.f32.mxu0 0.0
        %1711 = vmatmul.mubr.f32.gmra.mrb[0].mxu0 %v1555
        %v1712 = vpop.f32.mrb[0].mxu0
        %v1713 = vadd.f32 %v1599, %v1712
        %v1714 = vpop.f32.mrb[0].mxu0
        %1715 = vmatprep.mubr.f32.mxu0 0.0
        %1716 = vmatmul.mubr.f32.gmra.mrb[0].mxu0 %v1556
        %v1717 = vpop.f32.mrb[0].mxu0
        %v1718 = vadd.f32 %v1599, %v1717
        %v1719 = vpop.f32.mrb[0].mxu0
        %1720 = vmatprep.mubr.f32.mxu0 0.0
        %1721 = vmatmul.mubr.f32.gmra.mrb[0].mxu0 %v1557
        %v1722 = vpop.f32.mrb[0].mxu0
        %v1723 = vadd.f32 %v1599, %v1722
        %v1724 = vpop.f32.mrb[0].mxu0
        %1725 = vmatprep.mubr.f32.mxu0 0.0
        %1726 = vmatmul.mubr.f32.gmra.mrb[0].mxu0 %v1558
        %v1727 = vpop.f32.mrb[0].mxu0
        %v1728 = vadd.f32 %v1599, %v1727
        %v1729 = vpop.f32.mrb[0].mxu0
        %1730 = vmatprep.mubr.f32.mxu0 0.0
        %1731 = vmatmul.mubr.f32.gmra.mrb[0].mxu0 %v1559
        %v1732 = vpop.f32.mrb[0].mxu0
        %v1733 = vadd.f32 %v1599, %v1732
        %v1734 = vpop.f32.mrb[0].mxu0
        %1735 = vmatprep.mubr.f32.mxu0 0.0
        %1736 = vmatmul.mubr.f32.gmra.mrb[0].mxu0 %v1560
        %v1737 = vpop.f32.mrb[0].mxu0
        %v1738 = vadd.f32 %v1599, %v1737
        %v1739 = vpop.f32.mrb[0].mxu0
        %1740 = vmatprep.mubr.f32.mxu0 0.0
        %1741 = vmatmul.mubr.f32.gmra.mrb[0].mxu0 %v1561
        %v1742 = vpop.f32.mrb[0].mxu0
        %v1743 = vadd.f32 %v1599, %v1742
        %v1744 = vpop.f32.mrb[0].mxu0
        %1745 = vmatprep.mubr.f32.mxu0 0.0
        %1746 = vmatmul.mubr.f32.gmra.mrb[0].mxu0 %v1562
        %v1747 = vpop.f32.mrb[0].mxu0
        %v1748 = vadd.f32 %v1599, %v1747
        %v1749 = vpop.f32.mrb[0].mxu0
        %1750 = vmatprep.mubr.f32.mxu0 0.0
        %1751 = vmatmul.mubr.f32.gmra.mrb[0].mxu0 %v1563
        %v1752 = vpop.f32.mrb[0].mxu0
        %v1753 = vadd.f32 %v1599, %v1752
        %v1754 = vpop.f32.mrb[0].mxu0
        %1755 = vmatprep.mubr.f32.mxu0 0.0
        %1756 = vmatmul.mubr.f32.gmra.mrb[0].mxu0 %v1564
        %v1757 = vpop.f32.mrb[0].mxu0
        %v1758 = vadd.f32 %v1599, %v1757
        %v1759 = vpop.f32.mrb[0].mxu0
        %1760 = vmatprep.mubr.f32.mxu0 0.0
        %1761 = vmatmul.mubr.f32.gmra.mrb[0].mxu0 %v1565
        %v1762 = vpop.f32.mrb[0].mxu0
        %v1763 = vadd.f32 %v1599, %v1762
        %v1764 = vpop.f32.mrb[0].mxu0
        %1765 = vmatprep.mubr.f32.mxu0 0.0
        %1766 = vmatmul.mubr.f32.gmra.mrb[0].mxu0 %v1566
        %v1767 = vpop.f32.mrb[0].mxu0
        %v1768 = vadd.f32 %v1599, %v1767
        %v1769 = vpop.f32.mrb[0].mxu0
        %1770 = vmatprep.mubr.f32.mxu0 0.0
        %1771 = vmatmul.mubr.f32.gmra.mrb[0].mxu0 %v1567
        %v1772 = vpop.f32.mrb[0].mxu0
        %v1773 = vadd.f32 %v1599, %v1772
        %v1774 = vpop.f32.mrb[0].mxu0
        %1775 = vmatprep.mubr.f32.mxu0 0.0
        %1776 = vmatmul.mubr.f32.gmra.mrb[0].mxu0 %v1568
        %v1777 = vpop.f32.mrb[0].mxu0
        %v1778 = vadd.f32 %v1599, %v1777
        %v1779 = vpop.f32.mrb[0].mxu0
        %1780 = vmatprep.mubr.f32.mxu0 0.0
        %1781 = vmatmul.mubr.f32.gmra.mrb[0].mxu0 %v1569
        %v1782 = vpop.f32.mrb[0].mxu0
        %v1783 = vadd.f32 %v1599, %v1782
        %v1784 = vpop.f32.mrb[0].mxu0
        %1785 = vmatprep.mubr.f32.mxu0 0.0
        %1786 = vmatmul.mubr.f32.gmra.mrb[0].mxu0 %v1570
        %v1787 = vpop.f32.mrb[0].mxu0
        %v1788 = vadd.f32 %v1599, %v1787
        %v1789 = vpop.f32.mrb[0].mxu0
        %1790 = vmatprep.mubr.f32.mxu0 0.0
        %1791 = vmatmul.mubr.f32.gmra.mrb[0].mxu0 %v1571
        %v1792 = vpop.f32.mrb[0].mxu0
        %v1793 = vadd.f32 %v1599, %v1792
        %v1794 = vpop.f32.mrb[0].mxu0
        %1795 = vmatprep.mubr.f32.mxu0 0.0
        %1796 = vmatmul.mubr.f32.gmra.mrb[0].mxu0 %v1572
        %v1797 = vpop.f32.mrb[0].mxu0
        %v1798 = vadd.f32 %v1599, %v1797
        %v1799 = vpop.f32.mrb[0].mxu0
        %1800 = vmatprep.mubr.f32.mxu0 0.0
        %1801 = vmatmul.mubr.f32.gmra.mrb[0].mxu0 %v1573
        %v1802 = vpop.f32.mrb[0].mxu0
        %v1803 = vadd.f32 %v1599, %v1802
        %v1804 = vpop.f32.mrb[0].mxu0
        %1805 = vmatprep.mubr.f32.mxu0 0.0
        %1806 = vmatmul.mubr.f32.gmra.mrb[0].mxu0 %v1574
        %v1807 = vpop.f32.mrb[0].mxu0
        %v1808 = vadd.f32 %v1599, %v1807
        %v1809 = vpop.f32.mrb[0].mxu0
        %1810 = vmatprep.mubr.f32.mxu0 0.0
        %1811 = vmatmul.mubr.f32.gmra.mrb[0].mxu0 %v1575
        %v1812 = vpop.f32.mrb[0].mxu0
        %v1813 = vadd.f32 %v1599, %v1812
        %v1814 = vpop.f32.mrb[0].mxu0
        %1815 = vmatprep.mubr.f32.mxu0 0.0
        %1816 = vmatmul.mubr.f32.gmra.mrb[0].mxu0 %v1576
        %v1817 = vpop.f32.mrb[0].mxu0
        %v1818 = vadd.f32 %v1599, %v1817
        %v1819 = vpop.f32.mrb[0].mxu0
        %1820 = vmatprep.mubr.f32.mxu0 0.0
        %1821 = vmatmul.mubr.f32.gmra.mrb[0].mxu0 %v1577
        %v1822 = vpop.f32.mrb[0].mxu0
        %v1823 = vadd.f32 %v1599, %v1822
        %v1824 = vpop.f32.mrb[0].mxu0
        %1825 = vdwg.mxu0
        %v1826 = vtanh.pop %v1668
        %v1827 = vtanh.pop %v1673
        %v1828 = vtanh.pop %v1678
        %v1829 = vtanh.pop %v1683
        %v1830 = vtanh.pop %v1688
        %v1831 = vtanh.pop %v1693
        %v1832 = vtanh.pop %v1698
        %v1833 = vtanh.pop %v1703
        %v1834 = vtanh.pop %v1708
        %v1835 = vtanh.pop %v1713
        %v1836 = vtanh.pop %v1718
        %v1837 = vtanh.pop %v1723
        %v1838 = vtanh.pop %v1728
        %v1839 = vtanh.pop %v1733
        %v1840 = vtanh.pop %v1738
        %v1841 = vtanh.pop %v1743
        %v1842 = vtanh.pop %v1748
        %v1843 = vtanh.pop %v1753
        %v1844 = vtanh.pop %v1758
        %v1845 = vtanh.pop %v1763
        %v1846 = vtanh.pop %v1768
        %v1847 = vtanh.pop %v1773
        %v1848 = vtanh.pop %v1778
        %v1849 = vtanh.pop %v1783
        %v1850 = vtanh.pop %v1788
        %v1851 = vtanh.pop %v1793
        %v1852 = vtanh.pop %v1798
        %v1853 = vtanh.pop %v1803
        %v1854 = vtanh.pop %v1808
        %v1855 = vtanh.pop %v1813
        %v1856 = vtanh.pop %v1818
        %v1857 = vtanh.pop %v1823
        %v1858 = vmul.f32 %v1826, %v1138
        %v1859 = vmul.f32 %v1827, %v1139
        %v1860 = vmul.f32 %v1828, %v1140
        %v1861 = vmul.f32 %v1829, %v1141
        %v1862 = vmul.f32 %v1830, %v1142
        %v1863 = vmul.f32 %v1831, %v1143
        %v1864 = vmul.f32 %v1832, %v1144
        %v1865 = vmul.f32 %v1833, %v1145
        %v1866 = vmul.f32 %v1834, %v1146
        %v1867 = vmul.f32 %v1835, %v1147
        %v1868 = vmul.f32 %v1836, %v1148
        %v1869 = vmul.f32 %v1837, %v1149
        %v1870 = vmul.f32 %v1838, %v1150
        %v1871 = vmul.f32 %v1839, %v1151
        %v1872 = vmul.f32 %v1840, %v1152
        %v1873 = vmul.f32 %v1841, %v1153
        %v1874 = vmul.f32 %v1842, %v1154
        %v1875 = vmul.f32 %v1843, %v1155
        %v1876 = vmul.f32 %v1844, %v1156
        %v1877 = vmul.f32 %v1845, %v1157
        %v1878 = vmul.f32 %v1846, %v1158
        %v1879 = vmul.f32 %v1847, %v1159
        %v1880 = vmul.f32 %v1848, %v1160
        %v1881 = vmul.f32 %v1849, %v1161
        %v1882 = vmul.f32 %v1850, %v1162
        %v1883 = vmul.f32 %v1851, %v1163
        %v1884 = vmul.f32 %v1852, %v1164
        %v1885 = vmul.f32 %v1853, %v1165
        %v1886 = vmul.f32 %v1854, %v1166
        %v1887 = vmul.f32 %v1855, %v1167
        %v1888 = vmul.f32 %v1856, %v1168
        %v1889 = vmul.f32 %v1857, %v1169
        %v1890 = vadd.f32 %v1043, %v1858
        %v1891 = vadd.f32 %v1046, %v1859
        %v1892 = vadd.f32 %v1049, %v1860
        %v1893 = vadd.f32 %v1052, %v1861
        %v1894 = vadd.f32 %v1055, %v1862
        %v1895 = vadd.f32 %v1058, %v1863
        %v1896 = vadd.f32 %v1061, %v1864
        %v1897 = vadd.f32 %v1064, %v1865
        %v1898 = vadd.f32 %v1067, %v1866
        %v1899 = vadd.f32 %v1070, %v1867
        %v1900 = vadd.f32 %v1073, %v1868
        %v1901 = vadd.f32 %v1076, %v1869
        %v1902 = vadd.f32 %v1079, %v1870
        %v1903 = vadd.f32 %v1082, %v1871
        %v1904 = vadd.f32 %v1085, %v1872
        %v1905 = vadd.f32 %v1088, %v1873
        %v1906 = vadd.f32 %v1091, %v1874
        %v1907 = vadd.f32 %v1094, %v1875
        %v1908 = vadd.f32 %v1097, %v1876
        %v1909 = vadd.f32 %v1100, %v1877
        %v1910 = vadd.f32 %v1103, %v1878
        %v1911 = vadd.f32 %v1106, %v1879
        %v1912 = vadd.f32 %v1109, %v1880
        %v1913 = vadd.f32 %v1112, %v1881
        %v1914 = vadd.f32 %v1115, %v1882
        %v1915 = vadd.f32 %v1118, %v1883
        %v1916 = vadd.f32 %v1121, %v1884
        %v1917 = vadd.f32 %v1124, %v1885
        %v1918 = vadd.f32 %v1127, %v1886
        %v1919 = vadd.f32 %v1130, %v1887
        %v1920 = vadd.f32 %v1133, %v1888
        %v1921 = vadd.f32 %v1136, %v1889
        %v1922 = vld [vmem:[%s7] sm:$0xff]
        %v1923 = vld [vmem:[%s7 + $0x8] sm:$0xff]
        %v1924 = vld [vmem:[%s7 + $0x10] sm:$0xff]
        %v1925 = vld [vmem:[%s7 + $0x18] sm:$0xff]
        %v1926 = vld [vmem:[%s7 + $0x20] sm:$0xff]
        %v1927 = vld [vmem:[%s7 + $0x28] sm:$0xff]
        %v1928 = vld [vmem:[%s7 + $0x30] sm:$0xff]
        %v1929 = vld [vmem:[%s7 + $0x38] sm:$0xff]
        %v1930 = vld [vmem:[%s7 + $0x40] sm:$0xff]
        %v1931 = vld [vmem:[%s7 + $0x48] sm:$0xff]
        %v1932 = vld [vmem:[%s7 + $0x50] sm:$0xff]
        %v1933 = vld [vmem:[%s7 + $0x58] sm:$0xff]
        %v1934 = vld [vmem:[%s7 + $0x60] sm:$0xff]
        %v1935 = vld [vmem:[%s7 + $0x68] sm:$0xff]
        %v1936 = vld [vmem:[%s7 + $0x70] sm:$0xff]
        %v1937 = vld [vmem:[%s7 + $0x78] sm:$0xff]
        %v1938 = vld [vmem:[%s8] sm:$0x1]
        %v1940 = vlaneseq
        %v1941 = vshrl.u32 %v1940, 7
        %v1942 = vsub.s32 0, %v1941
        %v1943 = vrot.slane %v1938, %v1942
        %1945 = vmatprep.subr.mxu0 0.0
        %1946 = vmatpush1.msra.mxu0 %v1922
        %1947 = vmatprep.subr.mxu0 0.0
        %1948 = vmatpush1.msra.mxu0 %v1923
        %1949 = vmatprep.subr.mxu0 0.0
        %1950 = vmatpush1.msra.mxu0 %v1924
        %1951 = vmatprep.subr.mxu0 0.0
        %1952 = vmatpush1.msra.mxu0 %v1925
        %1953 = vmatprep.subr.mxu0 0.0
        %1954 = vmatpush1.msra.mxu0 %v1926
        %1955 = vmatprep.subr.mxu0 0.0
        %1956 = vmatpush1.msra.mxu0 %v1927
        %1957 = vmatprep.subr.mxu0 0.0
        %1958 = vmatpush1.msra.mxu0 %v1928
        %1959 = vmatprep.subr.mxu0 0.0
        %1960 = vmatpush1.msra.mxu0 %v1929
        %1961 = vmatprep.subr.mxu0 0.0
        %1962 = vmatpush1.msra.mxu0 %v1930
        %1963 = vmatprep.subr.mxu0 0.0
        %1964 = vmatpush1.msra.mxu0 %v1931
        %1965 = vmatprep.subr.mxu0 0.0
        %1966 = vmatpush1.msra.mxu0 %v1932
        %1967 = vmatprep.subr.mxu0 0.0
        %1968 = vmatpush1.msra.mxu0 %v1933
        %1969 = vmatprep.subr.mxu0 0.0
        %1970 = vmatpush1.msra.mxu0 %v1934
        %1971 = vmatprep.subr.mxu0 0.0
        %1972 = vmatpush1.msra.mxu0 %v1935
        %1973 = vmatprep.subr.mxu0 0.0
        %1974 = vmatpush1.msra.mxu0 %v1936
        %1975 = vmatprep.subr.mxu0 0.0
        %1976 = vmatpush1.msra.mxu0 %v1937
        %1977 = vmatprep.subr.mxu0 0.0
        %1978 = vmatpush1.msra.mxu0 0.0
        %1979 = vmatprep.subr.mxu0 0.0
        %1980 = vmatpush1.msra.mxu0 0.0
        %1981 = vmatprep.subr.mxu0 0.0
        %1982 = vmatpush1.msra.mxu0 0.0
        %1983 = vmatprep.subr.mxu0 0.0
        %1984 = vmatpush1.msra.mxu0 0.0
        %1985 = vmatprep.subr.mxu0 0.0
        %1986 = vmatpush1.msra.mxu0 0.0
        %1987 = vmatprep.subr.mxu0 0.0
        %1988 = vmatpush1.msra.mxu0 0.0
        %1989 = vmatprep.subr.mxu0 0.0
        %1990 = vmatpush1.msra.mxu0 0.0
        %1991 = vmatprep.subr.mxu0 0.0
        %1992 = vmatpush1.msra.mxu0 0.0
        %1993 = vmatprep.subr.mxu0 0.0
        %1994 = vmatpush1.msra.mxu0 0.0
        %1995 = vmatprep.subr.mxu0 0.0
        %1996 = vmatpush1.msra.mxu0 0.0
        %1997 = vmatprep.subr.mxu0 0.0
        %1998 = vmatpush1.msra.mxu0 0.0
        %1999 = vmatprep.subr.mxu0 0.0
        %2000 = vmatpush1.msra.mxu0 0.0
        %2001 = vmatprep.subr.mxu0 0.0
        %2002 = vmatpush1.msra.mxu0 0.0
        %2003 = vmatprep.subr.mxu0 0.0
        %2004 = vmatpush1.msra.mxu0 0.0
        %2005 = vmatprep.subr.mxu0 0.0
        %2006 = vmatpush1.msra.mxu0 0.0
        %2007 = vmatprep.subr.mxu0 0.0
        %2008 = vmatpush1.msra.mxu0 0.0
        %2009 = vmatprep.mubr.f32.mxu0 0.0
        %2010 = vmatmul.mubr.f32.gmra.mrb[0].mxu0 %v1890
        %v2011 = vpop.f32.mrb[0].mxu0
        %v2012 = vadd.f32 %v1943, %v2011
        %v2013 = vpop.f32.mrb[0].mxu0
        %2014 = vmatprep.mubr.f32.mxu0 0.0
        %2015 = vmatmul.mubr.f32.gmra.mrb[0].mxu0 %v1891
        %v2016 = vpop.f32.mrb[0].mxu0
        %v2017 = vadd.f32 %v1943, %v2016
        %v2018 = vpop.f32.mrb[0].mxu0
        %2019 = vmatprep.mubr.f32.mxu0 0.0
        %2020 = vmatmul.mubr.f32.gmra.mrb[0].mxu0 %v1892
        %v2021 = vpop.f32.mrb[0].mxu0
        %v2022 = vadd.f32 %v1943, %v2021
        %v2023 = vpop.f32.mrb[0].mxu0
        %2024 = vmatprep.mubr.f32.mxu0 0.0
        %2025 = vmatmul.mubr.f32.gmra.mrb[0].mxu0 %v1893
        %v2026 = vpop.f32.mrb[0].mxu0
        %v2027 = vadd.f32 %v1943, %v2026
        %v2028 = vpop.f32.mrb[0].mxu0
        %2029 = vmatprep.mubr.f32.mxu0 0.0
        %2030 = vmatmul.mubr.f32.gmra.mrb[0].mxu0 %v1894
        %v2031 = vpop.f32.mrb[0].mxu0
        %v2032 = vadd.f32 %v1943, %v2031
        %v2033 = vpop.f32.mrb[0].mxu0
        %2034 = vmatprep.mubr.f32.mxu0 0.0
        %2035 = vmatmul.mubr.f32.gmra.mrb[0].mxu0 %v1895
        %v2036 = vpop.f32.mrb[0].mxu0
        %v2037 = vadd.f32 %v1943, %v2036
        %v2038 = vpop.f32.mrb[0].mxu0
        %2039 = vmatprep.mubr.f32.mxu0 0.0
        %2040 = vmatmul.mubr.f32.gmra.mrb[0].mxu0 %v1896
        %v2041 = vpop.f32.mrb[0].mxu0
        %v2042 = vadd.f32 %v1943, %v2041
        %v2043 = vpop.f32.mrb[0].mxu0
        %2044 = vmatprep.mubr.f32.mxu0 0.0
        %2045 = vmatmul.mubr.f32.gmra.mrb[0].mxu0 %v1897
        %v2046 = vpop.f32.mrb[0].mxu0
        %v2047 = vadd.f32 %v1943, %v2046
        %v2048 = vpop.f32.mrb[0].mxu0
        %2049 = vmatprep.mubr.f32.mxu0 0.0
        %2050 = vmatmul.mubr.f32.gmra.mrb[0].mxu0 %v1898
        %v2051 = vpop.f32.mrb[0].mxu0
        %v2052 = vadd.f32 %v1943, %v2051
        %v2053 = vpop.f32.mrb[0].mxu0
        %2054 = vmatprep.mubr.f32.mxu0 0.0
        %2055 = vmatmul.mubr.f32.gmra.mrb[0].mxu0 %v1899
        %v2056 = vpop.f32.mrb[0].mxu0
        %v2057 = vadd.f32 %v1943, %v2056
        %v2058 = vpop.f32.mrb[0].mxu0
        %2059 = vmatprep.mubr.f32.mxu0 0.0
        %2060 = vmatmul.mubr.f32.gmra.mrb[0].mxu0 %v1900
        %v2061 = vpop.f32.mrb[0].mxu0
        %v2062 = vadd.f32 %v1943, %v2061
        %v2063 = vpop.f32.mrb[0].mxu0
        %2064 = vmatprep.mubr.f32.mxu0 0.0
        %2065 = vmatmul.mubr.f32.gmra.mrb[0].mxu0 %v1901
        %v2066 = vpop.f32.mrb[0].mxu0
        %v2067 = vadd.f32 %v1943, %v2066
        %v2068 = vpop.f32.mrb[0].mxu0
        %2069 = vmatprep.mubr.f32.mxu0 0.0
        %2070 = vmatmul.mubr.f32.gmra.mrb[0].mxu0 %v1902
        %v2071 = vpop.f32.mrb[0].mxu0
        %v2072 = vadd.f32 %v1943, %v2071
        %v2073 = vpop.f32.mrb[0].mxu0
        %2074 = vmatprep.mubr.f32.mxu0 0.0
        %2075 = vmatmul.mubr.f32.gmra.mrb[0].mxu0 %v1903
        %v2076 = vpop.f32.mrb[0].mxu0
        %v2077 = vadd.f32 %v1943, %v2076
        %v2078 = vpop.f32.mrb[0].mxu0
        %2079 = vmatprep.mubr.f32.mxu0 0.0
        %2080 = vmatmul.mubr.f32.gmra.mrb[0].mxu0 %v1904
        %v2081 = vpop.f32.mrb[0].mxu0
        %v2082 = vadd.f32 %v1943, %v2081
        %v2083 = vpop.f32.mrb[0].mxu0
        %2084 = vmatprep.mubr.f32.mxu0 0.0
        %2085 = vmatmul.mubr.f32.gmra.mrb[0].mxu0 %v1905
        %v2086 = vpop.f32.mrb[0].mxu0
        %v2087 = vadd.f32 %v1943, %v2086
        %v2088 = vpop.f32.mrb[0].mxu0
        %2089 = vmatprep.mubr.f32.mxu0 0.0
        %2090 = vmatmul.mubr.f32.gmra.mrb[0].mxu0 %v1906
        %v2091 = vpop.f32.mrb[0].mxu0
        %v2092 = vadd.f32 %v1943, %v2091
        %v2093 = vpop.f32.mrb[0].mxu0
        %2094 = vmatprep.mubr.f32.mxu0 0.0
        %2095 = vmatmul.mubr.f32.gmra.mrb[0].mxu0 %v1907
        %v2096 = vpop.f32.mrb[0].mxu0
        %v2097 = vadd.f32 %v1943, %v2096
        %v2098 = vpop.f32.mrb[0].mxu0
        %2099 = vmatprep.mubr.f32.mxu0 0.0
        %2100 = vmatmul.mubr.f32.gmra.mrb[0].mxu0 %v1908
        %v2101 = vpop.f32.mrb[0].mxu0
        %v2102 = vadd.f32 %v1943, %v2101
        %v2103 = vpop.f32.mrb[0].mxu0
        %2104 = vmatprep.mubr.f32.mxu0 0.0
        %2105 = vmatmul.mubr.f32.gmra.mrb[0].mxu0 %v1909
        %v2106 = vpop.f32.mrb[0].mxu0
        %v2107 = vadd.f32 %v1943, %v2106
        %v2108 = vpop.f32.mrb[0].mxu0
        %2109 = vmatprep.mubr.f32.mxu0 0.0
        %2110 = vmatmul.mubr.f32.gmra.mrb[0].mxu0 %v1910
        %v2111 = vpop.f32.mrb[0].mxu0
        %v2112 = vadd.f32 %v1943, %v2111
        %v2113 = vpop.f32.mrb[0].mxu0
        %2114 = vmatprep.mubr.f32.mxu0 0.0
        %2115 = vmatmul.mubr.f32.gmra.mrb[0].mxu0 %v1911
        %v2116 = vpop.f32.mrb[0].mxu0
        %v2117 = vadd.f32 %v1943, %v2116
        %v2118 = vpop.f32.mrb[0].mxu0
        %2119 = vmatprep.mubr.f32.mxu0 0.0
        %2120 = vmatmul.mubr.f32.gmra.mrb[0].mxu0 %v1912
        %v2121 = vpop.f32.mrb[0].mxu0
        %v2122 = vadd.f32 %v1943, %v2121
        %v2123 = vpop.f32.mrb[0].mxu0
        %2124 = vmatprep.mubr.f32.mxu0 0.0
        %2125 = vmatmul.mubr.f32.gmra.mrb[0].mxu0 %v1913
        %v2126 = vpop.f32.mrb[0].mxu0
        %v2127 = vadd.f32 %v1943, %v2126
        %v2128 = vpop.f32.mrb[0].mxu0
        %2129 = vmatprep.mubr.f32.mxu0 0.0
        %2130 = vmatmul.mubr.f32.gmra.mrb[0].mxu0 %v1914
        %v2131 = vpop.f32.mrb[0].mxu0
        %v2132 = vadd.f32 %v1943, %v2131
        %v2133 = vpop.f32.mrb[0].mxu0
        %2134 = vmatprep.mubr.f32.mxu0 0.0
        %2135 = vmatmul.mubr.f32.gmra.mrb[0].mxu0 %v1915
        %v2136 = vpop.f32.mrb[0].mxu0
        %v2137 = vadd.f32 %v1943, %v2136
        %v2138 = vpop.f32.mrb[0].mxu0
        %2139 = vmatprep.mubr.f32.mxu0 0.0
        %2140 = vmatmul.mubr.f32.gmra.mrb[0].mxu0 %v1916
        %v2141 = vpop.f32.mrb[0].mxu0
        %v2142 = vadd.f32 %v1943, %v2141
        %v2143 = vpop.f32.mrb[0].mxu0
        %2144 = vmatprep.mubr.f32.mxu0 0.0
        %2145 = vmatmul.mubr.f32.gmra.mrb[0].mxu0 %v1917
        %v2146 = vpop.f32.mrb[0].mxu0
        %v2147 = vadd.f32 %v1943, %v2146
        %v2148 = vpop.f32.mrb[0].mxu0
        %2149 = vmatprep.mubr.f32.mxu0 0.0
        %2150 = vmatmul.mubr.f32.gmra.mrb[0].mxu0 %v1918
        %v2151 = vpop.f32.mrb[0].mxu0
        %v2152 = vadd.f32 %v1943, %v2151
        %v2153 = vpop.f32.mrb[0].mxu0
        %2154 = vmatprep.mubr.f32.mxu0 0.0
        %2155 = vmatmul.mubr.f32.gmra.mrb[0].mxu0 %v1919
        %v2156 = vpop.f32.mrb[0].mxu0
        %v2157 = vadd.f32 %v1943, %v2156
        %v2158 = vpop.f32.mrb[0].mxu0
        %2159 = vmatprep.mubr.f32.mxu0 0.0
        %2160 = vmatmul.mubr.f32.gmra.mrb[0].mxu0 %v1920
        %v2161 = vpop.f32.mrb[0].mxu0
        %v2162 = vadd.f32 %v1943, %v2161
        %v2163 = vpop.f32.mrb[0].mxu0
        %2164 = vmatprep.mubr.f32.mxu0 0.0
        %2165 = vmatmul.mubr.f32.gmra.mrb[0].mxu0 %v1921
        %v2166 = vpop.f32.mrb[0].mxu0
        %v2167 = vadd.f32 %v1943, %v2166
        %v2168 = vpop.f32.mrb[0].mxu0
        %2169 = vdwg.mxu0
        %v2170 = vtanh.pop %v2012
        %v2171 = vtanh.pop %v2017
        %v2172 = vtanh.pop %v2022
        %v2173 = vtanh.pop %v2027
        %v2174 = vtanh.pop %v2032
        %v2175 = vtanh.pop %v2037
        %v2176 = vtanh.pop %v2042
        %v2177 = vtanh.pop %v2047
        %v2178 = vtanh.pop %v2052
        %v2179 = vtanh.pop %v2057
        %v2180 = vtanh.pop %v2062
        %v2181 = vtanh.pop %v2067
        %v2182 = vtanh.pop %v2072
        %v2183 = vtanh.pop %v2077
        %v2184 = vtanh.pop %v2082
        %v2185 = vtanh.pop %v2087
        %v2186 = vtanh.pop %v2092
        %v2187 = vtanh.pop %v2097
        %v2188 = vtanh.pop %v2102
        %v2189 = vtanh.pop %v2107
        %v2190 = vtanh.pop %v2112
        %v2191 = vtanh.pop %v2117
        %v2192 = vtanh.pop %v2122
        %v2193 = vtanh.pop %v2127
        %v2194 = vtanh.pop %v2132
        %v2195 = vtanh.pop %v2137
        %v2196 = vtanh.pop %v2142
        %v2197 = vtanh.pop %v2147
        %v2198 = vtanh.pop %v2152
        %v2199 = vtanh.pop %v2157
        %v2200 = vtanh.pop %v2162
        %v2201 = vtanh.pop %v2167
        %v2202 = vmul.f32 %v2170, %v1138
        %v2203 = vmul.f32 %v2171, %v1139
        %v2204 = vmul.f32 %v2172, %v1140
        %v2205 = vmul.f32 %v2173, %v1141
        %v2206 = vmul.f32 %v2174, %v1142
        %v2207 = vmul.f32 %v2175, %v1143
        %v2208 = vmul.f32 %v2176, %v1144
        %v2209 = vmul.f32 %v2177, %v1145
        %v2210 = vmul.f32 %v2178, %v1146
        %v2211 = vmul.f32 %v2179, %v1147
        %v2212 = vmul.f32 %v2180, %v1148
        %v2213 = vmul.f32 %v2181, %v1149
        %v2214 = vmul.f32 %v2182, %v1150
        %v2215 = vmul.f32 %v2183, %v1151
        %v2216 = vmul.f32 %v2184, %v1152
        %v2217 = vmul.f32 %v2185, %v1153
        %v2218 = vmul.f32 %v2186, %v1154
        %v2219 = vmul.f32 %v2187, %v1155
        %v2220 = vmul.f32 %v2188, %v1156
        %v2221 = vmul.f32 %v2189, %v1157
        %v2222 = vmul.f32 %v2190, %v1158
        %v2223 = vmul.f32 %v2191, %v1159
        %v2224 = vmul.f32 %v2192, %v1160
        %v2225 = vmul.f32 %v2193, %v1161
        %v2226 = vmul.f32 %v2194, %v1162
        %v2227 = vmul.f32 %v2195, %v1163
        %v2228 = vmul.f32 %v2196, %v1164
        %v2229 = vmul.f32 %v2197, %v1165
        %v2230 = vmul.f32 %v2198, %v1166
        %v2231 = vmul.f32 %v2199, %v1167
        %v2232 = vmul.f32 %v2200, %v1168
        %v2233 = vmul.f32 %v2201, %v1169
        %v2234 = vadd.f32 %v1043, %v2202
        %v2235 = vadd.f32 %v1046, %v2203
        %v2236 = vadd.f32 %v1049, %v2204
        %v2237 = vadd.f32 %v1052, %v2205
        %v2238 = vadd.f32 %v1055, %v2206
        %v2239 = vadd.f32 %v1058, %v2207
        %v2240 = vadd.f32 %v1061, %v2208
        %v2241 = vadd.f32 %v1064, %v2209
        %v2242 = vadd.f32 %v1067, %v2210
        %v2243 = vadd.f32 %v1070, %v2211
        %v2244 = vadd.f32 %v1073, %v2212
        %v2245 = vadd.f32 %v1076, %v2213
        %v2246 = vadd.f32 %v1079, %v2214
        %v2247 = vadd.f32 %v1082, %v2215
        %v2248 = vadd.f32 %v1085, %v2216
        %v2249 = vadd.f32 %v1088, %v2217
        %v2250 = vadd.f32 %v1091, %v2218
        %v2251 = vadd.f32 %v1094, %v2219
        %v2252 = vadd.f32 %v1097, %v2220
        %v2253 = vadd.f32 %v1100, %v2221
        %v2254 = vadd.f32 %v1103, %v2222
        %v2255 = vadd.f32 %v1106, %v2223
        %v2256 = vadd.f32 %v1109, %v2224
        %v2257 = vadd.f32 %v1112, %v2225
        %v2258 = vadd.f32 %v1115, %v2226
        %v2259 = vadd.f32 %v1118, %v2227
        %v2260 = vadd.f32 %v1121, %v2228
        %v2261 = vadd.f32 %v1124, %v2229
        %v2262 = vadd.f32 %v1127, %v2230
        %v2263 = vadd.f32 %v1130, %v2231
        %v2264 = vadd.f32 %v1133, %v2232
        %v2265 = vadd.f32 %v1136, %v2233
        %v2266 = vld [vmem:[%s9] sm:$0x1]
        %v2267 = vld [vmem:[#allocation2] sm:$0x1]
        %2269 = vset.pattern.permute.xlu0 0
        %2270 = vperm.xlu0 %2269, %v2267
        %v2271 = vpop.permute.xlu0 %2270
        %v2273 = vlaneseq
        %v2274 = vshrl.u32 %v2273, 7
        %v2275 = vsub.s32 0, %v2274
        %v2276 = vrot.slane %v2271, %v2275
        %2277 = vmatprep.subr.mxu0 0.0
        %2278 = vmatpush1.xpose.msra.mxu0 %v2234
        %2279 = vmatprep.subr.mxu0 0.0
        %2280 = vmatpush1.xpose.msra.mxu0 %v2235
        %2281 = vmatprep.subr.mxu0 0.0
        %2282 = vmatpush1.xpose.msra.mxu0 %v2236
        %2283 = vmatprep.subr.mxu0 0.0
        %2284 = vmatpush1.xpose.msra.mxu0 %v2237
        %2285 = vmatprep.subr.mxu0 0.0
        %2286 = vmatpush1.xpose.msra.mxu0 %v2238
        %2287 = vmatprep.subr.mxu0 0.0
        %2288 = vmatpush1.xpose.msra.mxu0 %v2239
        %2289 = vmatprep.subr.mxu0 0.0
        %2290 = vmatpush1.xpose.msra.mxu0 %v2240
        %2291 = vmatprep.subr.mxu0 0.0
        %2292 = vmatpush1.xpose.msra.mxu0 %v2241
        %2293 = vmatprep.subr.mxu0 0.0
        %2294 = vmatpush1.xpose.msra.mxu0 %v2242
        %2295 = vmatprep.subr.mxu0 0.0
        %2296 = vmatpush1.xpose.msra.mxu0 %v2243
        %2297 = vmatprep.subr.mxu0 0.0
        %2298 = vmatpush1.xpose.msra.mxu0 %v2244
        %2299 = vmatprep.subr.mxu0 0.0
        %2300 = vmatpush1.xpose.msra.mxu0 %v2245
        %2301 = vmatprep.subr.mxu0 0.0
        %2302 = vmatpush1.xpose.msra.mxu0 %v2246
        %2303 = vmatprep.subr.mxu0 0.0
        %2304 = vmatpush1.xpose.msra.mxu0 %v2247
        %2305 = vmatprep.subr.mxu0 0.0
        %2306 = vmatpush1.xpose.msra.mxu0 %v2248
        %2307 = vmatprep.subr.mxu0 0.0
        %2308 = vmatpush1.xpose.msra.mxu0 %v2249
        %2309 = vmatprep.subr.mxu0 0.0
        %2310 = vmatpush1.xpose.msra.mxu0 %v2250
        %2311 = vmatprep.subr.mxu0 0.0
        %2312 = vmatpush1.xpose.msra.mxu0 %v2251
        %2313 = vmatprep.subr.mxu0 0.0
        %2314 = vmatpush1.xpose.msra.mxu0 %v2252
        %2315 = vmatprep.subr.mxu0 0.0
        %2316 = vmatpush1.xpose.msra.mxu0 %v2253
        %2317 = vmatprep.subr.mxu0 0.0
        %2318 = vmatpush1.xpose.msra.mxu0 %v2254
        %2319 = vmatprep.subr.mxu0 0.0
        %2320 = vmatpush1.xpose.msra.mxu0 %v2255
        %2321 = vmatprep.subr.mxu0 0.0
        %2322 = vmatpush1.xpose.msra.mxu0 %v2256
        %2323 = vmatprep.subr.mxu0 0.0
        %2324 = vmatpush1.xpose.msra.mxu0 %v2257
        %2325 = vmatprep.subr.mxu0 0.0
        %2326 = vmatpush1.xpose.msra.mxu0 %v2258
        %2327 = vmatprep.subr.mxu0 0.0
        %2328 = vmatpush1.xpose.msra.mxu0 %v2259
        %2329 = vmatprep.subr.mxu0 0.0
        %2330 = vmatpush1.xpose.msra.mxu0 %v2260
        %2331 = vmatprep.subr.mxu0 0.0
        %2332 = vmatpush1.xpose.msra.mxu0 %v2261
        %2333 = vmatprep.subr.mxu0 0.0
        %2334 = vmatpush1.xpose.msra.mxu0 %v2262
        %2335 = vmatprep.subr.mxu0 0.0
        %2336 = vmatpush1.xpose.msra.mxu0 %v2263
        %2337 = vmatprep.subr.mxu0 0.0
        %2338 = vmatpush1.xpose.msra.mxu0 %v2264
        %2339 = vmatprep.subr.mxu0 0.0
        %2340 = vmatpush1.xpose.msra.mxu0 %v2265
        %2341 = vmatprep.mubr.f32.mxu0 0.0
        %2342 = vmatmul.mubr.f32.gmra.mrb[0].mxu0 %v2266
        %v2343 = vpop.f32.mrb[0].mxu0
        %v2344 = vadd.f32 %v2276, %v2343
        %v2345 = vpop.f32.mrb[0].mxu0
        %v2346 = vadd.f32 %v2276, %v2345
        %2347 = vdwg.mxu0
        %v2348 = vmul.f32 %v2344, 1.442695
        %v2349 = vpow.pop %v2348
        %v2350 = vmul.f32 %v2346, 1.442695
        %v2351 = vpow.pop %v2350
        %v2352 = vsub.f32 0.0, %v2349
        %v2353 = vsub.f32 0.0, %v2351
        %v2356 = vcombine.low %v2352, %v2353
        %v2358 = vunpack.c.l.s4 1966171168
        %v2359 = vunpack.c.0.s8 %v2358
        %v2360 = vlaneseq
        %v2361 = vshrl.u32 %v2360, 7
        %v2362 = vsub.s32 %v2359, %v2361
        %v2363 = vrot.slane %v2356, %v2362
        %v2365 = vunpack.c.l.s4 1966171168
        %v2366 = vunpack.c.0.s8 %v2365
        %v2367 = vlaneseq
        %v2368 = vshrl.u32 %v2367, 7
        %v2369 = vsub.s32 %v2366, %v2368
        %v2370 = vrot.slane %v2363, %v2369
        %v2372 = vlaneseq
        %vm2373 = vcmp.ge.s32.totalorder %v2372, 0
        %vm2374 = vcmp.lt.s32.totalorder %v2372, 256
        %vm2375 = vmand %vm2373, %vm2374
        %2376 = vst.msk [vmem:[%s382] sm:$0x3] %vm2375, %v2370
        %s2377 = sand.u32 %s271, 1
        %s2378 = scalar_lea.sflag [#allocation4], %s2377
        %s2379 = sand.u32 %s271, 1
        %s2380 = smul.addr %s2379, 2
        %s2381 = scalar_lea.vmem [#allocation3], %s2380
        // Predicated region
        $region65: #{tpu_custom_call.1} parent=63 // pred_check
          %p2382 = pneg %p281
        $region66: #{tpu_custom_call.1} parent=63 // pred_check_branch
          %2384 = sbr.rel (%p2382) target = $region68
        $region67: #{tpu_custom_call.1} parent=63 // pred_region
          %s2386 = ssub.s32 32, 32
          %2387 = vsyncadd %s2378, %s2386
          %s2388 = smul.addr %s27, 2
          %s2389 = smul.addr %s2388, 16
          %s2390 = scalar_lea.hbm %s11, %s2389
          %s2392 = sshll.u32 %s2381, 4
          %s2393 = int_to_ptr.vmem [resolvable:$true] %s2392
          %2395 = dma.vmem_to_hbm [thread:$0]  %s2393, 32, %s2390, %s2378
        $region68: #{tpu_custom_call.1} parent=63 // pred_fallthru
          _
      $region64: #{tpu_custom_call.1} parent=5 // pred_fallthru
        _
      %p2396 = scmp.le.s32.totalorder 2, %s22
      // Predicated region
      $region69: #{tpu_custom_call.1} parent=5 // pred_check
        %p2397 = pneg %p2396
      $region70: #{tpu_custom_call.1} parent=5 // pred_check_branch
        %2399 = sbr.rel (%p2397) target = $region72
      $region71: #{tpu_custom_call.1} parent=5 // pred_region
        %s2400 = ssub.s32 %s22, 2
        // Predicated region
        $region73: #{tpu_custom_call.1} parent=71 // pred_check
          %p2401 = pneg %p287
        $region74: #{tpu_custom_call.1} parent=71 // pred_check_branch
          %2403 = sbr.rel (%p2401) target = $region76
        $region75: #{tpu_custom_call.1} parent=71 // pred_region
          %s2404 = sand.u32 %s272, 1
          %s2405 = scalar_lea.sflag [#allocation4], %s2404
          %s2406 = sand.u32 %s272, 1
          %s2407 = smul.addr %s2406, 2
          %s2408 = scalar_lea.vmem [#allocation3], %s2407
          %2409 = dma.done %s2405, 32
        $region76: #{tpu_custom_call.1} parent=71 // pred_fallthru
          _
      $region72: #{tpu_custom_call.1} parent=5 // pred_fallthru
        _
    $region6: #{tpu_custom_call.1} parent=1 // loop_footer
      %s26 = sadd.s32 1, %s22
    $region7: #{tpu_custom_call.1} parent=1 // loop_footer_branch
      %21 = sbr.rel target = $region3
    $region8: #{tpu_custom_call.1} parent=1 // loop_exit
      _
    %2410 = vsyncpa [#allocation4], 1
    %s2411 = scalar_lea.sflag [#allocation4], 1
    %2412 = vsyncpa %s2411, 1

</llo_original>
